<compile_context>
chip_gen: v7x
topology: tpu7x:2x2x1
jax: 0.10.0
libtpu: 0.0.40
codegen_flags: <defaults>
</compile_context>

<pallas_src>
import jax
import jax.numpy as jnp
from jax.experimental import pallas as pl
from jax.experimental.pallas import tpu as pltpu


def _cdiv(a, b):
    return -(-a // b)


def _round_up(n, m):
    return _cdiv(n, m) * m


# Bias-blob row layout: (8, 512) f32, row r holds the r-th layer bias, left-justified.
_B1, _B2, _B3, _BH, _B4, _B5, _B6, _B7 = range(8)


# ----------------------------------------------------------------------------
# Pallas kernel: full CVAE forward (encode -> reparameterize -> decode).
# One grid step processes tile_b rows of the batch; all weights/biases are
# VMEM-resident (constant index_map) across grid steps.
# ----------------------------------------------------------------------------
def make_cvae_kernel(act_dtype):
    """act_dtype: dtype of the bias-add + ReLU epilogues on the wide hidden
    layers. bfloat16 on v6e/v7x (native bf16 VPU -> half the VALU passes),
    float32 on v5e (no bf16 VPU path). MXU accumulation is always f32."""

    def cvae_kernel(
        xce_ref,                  # [tb, 19] f32  packed [x(7) | cond(2) | eps(10)]
        w1_ref,                   # (9, 512)  bf16  fc1 (x|cond fused, K=9 on MXU)
        w2_ref, w3_ref,           # (512,256) / (256,128) bf16
        wh_ref,                   # (128, 20) bf16  fused [fc21 | fc22]
        w4z_ref, w4c_ref,         # (10,128) / (2,128) bf16  fc4 split (both MXU)
        w5_ref, w6_ref, w7_ref,   # (128,256) / (256,512) / (512,7) bf16
        bias_ref,                 # (8, 512) f32  one row per layer bias
        out_ref,                  # [tb, 128] f32  lanes 0:20=[mu|logvar], 32:39=recon
    ):
        f32, bf16 = jnp.float32, jnp.bfloat16

        xce = xce_ref[...]
        xc = xce[:, 0:9].astype(bf16)      # fc1 input: [x | condition]
        cond = xce[:, 7:9].astype(bf16)    # condition (for fc4)
        eps = xce[:, 9:19]                 # f32 reparameterization noise

        def bvec(row, n):
            return bias_ref[row:row + 1, 0:n]

        def linear_relu(a_bf16, w_ref, brow, n):
            acc = jnp.dot(a_bf16, w_ref[...], preferred_element_type=f32)
            h = jax.nn.relu(acc.astype(act_dtype) + bvec(brow, n).astype(act_dtype))
            return h.astype(bf16)

        # ---- encoder ----  (dropout p=0.2 is identity in eval mode)
        h1 = linear_relu(xc, w1_ref, _B1, 512)
        h2 = linear_relu(h1, w2_ref, _B2, 256)
        h3 = linear_relu(h2, w3_ref, _B3, 128)

        # Fused mu/logvar head; keep the tiny 20-lane epilogue in f32.
        head = jnp.dot(h3, wh_ref[...], preferred_element_type=f32) + bvec(_BH, 20)
        mu, logvar = head[:, 0:10], head[:, 10:20]

        # ---- reparameterize ----
        z = mu + eps * jnp.exp(0.5 * logvar)

        # ---- decoder ----
        # fc4: z part (K=10) and condition part (K=2) both on the MXU.
        acc4 = (jnp.dot(z.astype(bf16), w4z_ref[...], preferred_element_type=f32)
                + jnp.dot(cond, w4c_ref[...], preferred_element_type=f32))
        h4 = jax.nn.relu(acc4.astype(act_dtype)
                         + bvec(_B4, 128).astype(act_dtype)).astype(bf16)
        h5 = linear_relu(h4, w5_ref, _B5, 256)
        h6 = linear_relu(h5, w6_ref, _B6, 512)
        recon = jax.nn.sigmoid(
            jnp.dot(h6, w7_ref[...], preferred_element_type=f32) + bvec(_B7, 7))

        # Lane-dense packed output via direct sub-slice stores (no in-kernel
        # concatenate / lane rotation):
        #   lanes  0:20  -> [mu | logvar]  (computed at lanes 0:20, no shift)
        #   lanes 32:39  -> recon
        out_ref[...] = jnp.zeros_like(out_ref)   # keep unused lanes deterministic
        out_ref[:, 0:20] = head
        out_ref[:, 32:39] = recon

    return cvae_kernel


# ----------------------------------------------------------------------------
# Parameter init (deterministic, PyTorch-Linear-like uniform fan-in init)
# ----------------------------------------------------------------------------
def init_params(key):
    keys = jax.random.split(key, 9)
    bf16 = jnp.bfloat16

    def lin(k, i, o):
        kw, kb = jax.random.split(k)
        bound = 1.0 / jnp.sqrt(i)
        w = jax.random.uniform(kw, (i, o), jnp.float32, -bound, bound)
        b = jax.random.uniform(kb, (o,), jnp.float32, -bound, bound)
        return w, b

    w1, b1 = lin(keys[0], 9, 512)       # fc1: in = cat(x(7), cond(2))
    w2, b2 = lin(keys[1], 512, 256)
    w3, b3 = lin(keys[2], 256, 128)
    w21, b21 = lin(keys[3], 128, 10)    # fc21 (mu)
    w22, b22 = lin(keys[4], 128, 10)    # fc22 (logvar)
    w4, b4 = lin(keys[5], 12, 128)      # fc4: in = cat(z(10), cond(2))
    w5, b5 = lin(keys[6], 128, 256)
    w6, b6 = lin(keys[7], 256, 512)
    w7, b7 = lin(keys[8], 512, 7)

    p = {
        "w1": w1.astype(bf16),                                   # (9,512)
        "w2": w2.astype(bf16), "w3": w3.astype(bf16),
        "wh": jnp.concatenate([w21, w22], axis=1).astype(bf16),  # (128,20)
        "w4z": w4[:10, :].astype(bf16),                          # (10,128)
        "w4c": w4[10:, :].astype(bf16),                          # (2,128)
        "w5": w5.astype(bf16), "w6": w6.astype(bf16), "w7": w7.astype(bf16),
    }
    bh = jnp.concatenate([b21, b22], axis=0)                     # (20,)
    blob = jnp.zeros((8, 512), jnp.float32)
    for r, b in enumerate([b1, b2, b3, bh, b4, b5, b6, b7]):
        blob = blob.at[r, : b.shape[0]].set(b)
    p["bias"] = blob
    return p


# ----------------------------------------------------------------------------
# Wrapper
# ----------------------------------------------------------------------------
def _epilogue_dtype():
    try:
        kind = jax.devices()[0].device_kind.lower()
    except Exception:  # pragma: no cover
        kind = ""
    # bf16 VPU only on v6e / v7x; keep f32 elementwise on v5e and older.
    if ("v6" in kind) or ("v7" in kind):
        return jnp.bfloat16
    return jnp.float32


def _choose_tiling(B, max_tile=512):
    # >= 2 grid steps so v7x can shard batch tiles over both TensorCores;
    # >= 4 steps for larger batches so double-buffering hides DMA/writeback;
    # balanced tile sizes so an unlucky B (e.g. 513) doesn't pad ~2x.
    n_tiles = max(2, _cdiv(B, max_tile))
    if B >= 2 * max_tile:
        n_tiles = max(n_tiles, 4)
    if n_tiles % 2:
        n_tiles += 1
    tile = max(8, _round_up(_cdiv(B, n_tiles), 8))
    Bp = _round_up(B, tile)
    return tile, Bp, Bp // tile


def cvae_forward(x, condition, eps, params, max_tile=512):
    B = x.shape[0]
    tile_b, Bp, grid_b = _choose_tiling(B, max_tile)

    # Single packed batch stream: [x | cond | eps] -> (B, 19) f32.
    xce = jnp.concatenate([x, condition, eps], axis=1)
    if Bp != B:
        xce = jnp.pad(xce, ((0, Bp - B), (0, 0)))

    weights = (
        params["w1"], params["w2"], params["w3"], params["wh"],
        params["w4z"], params["w4c"], params["w5"], params["w6"],
        params["w7"], params["bias"],
    )

    def resident(w):
        return pl.BlockSpec(w.shape, lambda i: (0, 0))

    in_specs = [pl.BlockSpec((tile_b, 19), lambda i: (i, 0))]
    in_specs += [resident(w) for w in weights]
    out_spec = pl.BlockSpec((tile_b, 128), lambda i: (i, 0))

    flops_per_row = 2 * (9 * 512 + 512 * 256 + 256 * 128 + 128 * 20
                         + 12 * 128 + 128 * 256 + 256 * 512 + 512 * 7)
    weight_bytes = sum(int(w.size) * w.dtype.itemsize for w in weights)
    cost = pl.CostEstimate(
        flops=flops_per_row * Bp,
        transcendentals=17 * Bp,                 # exp(10) + sigmoid(7) per row
        bytes_accessed=weight_bytes + Bp * (19 + 128) * 4,
    )

    packed = pl.pallas_call(
        make_cvae_kernel(_epilogue_dtype()),
        out_shape=jax.ShapeDtypeStruct((Bp, 128), jnp.float32),
        grid=(grid_b,),
        in_specs=in_specs,
        out_specs=out_spec,
        compiler_params=pltpu.CompilerParams(dimension_semantics=("parallel",)),
        cost_estimate=cost,
    )(xce, *weights)

    mu = packed[:B, 0:10]
    logvar = packed[:B, 10:20]
    recon = packed[:B, 32:39]
    return recon, mu, logvar


# ----------------------------------------------------------------------------
# Pure-JAX reference (same bf16-weight / f32-accumulate / act_dtype-epilogue
# numerics) for sanity check.
# ----------------------------------------------------------------------------
def cvae_ref(x, condition, eps, p, act_dtype):
    bf16, f32 = jnp.bfloat16, jnp.float32
    b = p["bias"]

    def lin_relu(a_bf16, w, bias_row, n):
        acc = jnp.dot(a_bf16, w, preferred_element_type=f32)
        h = jax.nn.relu(acc.astype(act_dtype) + b[bias_row, :n].astype(act_dtype))
        return h.astype(bf16)

    xc = jnp.concatenate([x, condition], axis=1).astype(bf16)
    h1 = lin_relu(xc, p["w1"], _B1, 512)
    h2 = lin_relu(h1, p["w2"], _B2, 256)
    h3 = lin_relu(h2, p["w3"], _B3, 128)
    head = jnp.dot(h3, p["wh"], preferred_element_type=f32) + b[_BH, :20]
    mu, logvar = head[:, :10], head[:, 10:]
    z = mu + eps * jnp.exp(0.5 * logvar)
    acc4 = (jnp.dot(z.astype(bf16), p["w4z"], preferred_element_type=f32)
            + jnp.dot(condition.astype(bf16), p["w4c"], preferred_element_type=f32))
    h4 = jax.nn.relu(acc4.astype(act_dtype) + b[_B4, :128].astype(act_dtype)).astype(bf16)
    h5 = lin_relu(h4, p["w5"], _B5, 256)
    h6 = lin_relu(h5, p["w6"], _B6, 512)
    recon = jax.nn.sigmoid(jnp.dot(h6, p["w7"], preferred_element_type=f32) + b[_B7, :7])
    return recon, mu, logvar


if __name__ == "__main__":
    key = jax.random.PRNGKey(0)
    k_param, k_x, k_c, k_eps = jax.random.split(key, 4)

    B = 8
    params = init_params(k_param)
    x = jax.random.normal(k_x, (B, 7), jnp.float32)
    condition = jax.random.normal(k_c, (B, 2), jnp.float32)
    eps = jax.random.normal(k_eps, (B, 10), jnp.float32)  # reparameterization noise

    recon, mu, logvar = jax.jit(cvae_forward)(x, condition, eps, params)
    jax.block_until_ready((recon, mu, logvar))

    r_ref, m_ref, lv_ref = cvae_ref(x, condition, eps, params, _epilogue_dtype())
    assert recon.shape == (B, 7) and mu.shape == (B, 10) and logvar.shape == (B, 10)
    assert jnp.allclose(recon, r_ref, atol=2e-2, rtol=2e-2), "recon mismatch"
    assert jnp.allclose(mu, m_ref, atol=2e-2, rtol=2e-2), "mu mismatch"
    assert jnp.allclose(logvar, lv_ref, atol=2e-2, rtol=2e-2), "logvar mismatch"

    print("KERNEL_OK")
</pallas_src>

<mosaic_0001>
module attributes {stable_mosaic.version = 11 : i64} {
  func.func @cvae_kernel(%arg0: i32, %arg1: memref<8x19xf32, #tpu.memory_space<vmem>>, %arg2: memref<9x512xbf16, #tpu.memory_space<vmem>>, %arg3: memref<512x256xbf16, #tpu.memory_space<vmem>>, %arg4: memref<256x128xbf16, #tpu.memory_space<vmem>>, %arg5: memref<128x20xbf16, #tpu.memory_space<vmem>>, %arg6: memref<10x128xbf16, #tpu.memory_space<vmem>>, %arg7: memref<2x128xbf16, #tpu.memory_space<vmem>>, %arg8: memref<128x256xbf16, #tpu.memory_space<vmem>>, %arg9: memref<256x512xbf16, #tpu.memory_space<vmem>>, %arg10: memref<512x7xbf16, #tpu.memory_space<vmem>>, %arg11: memref<8x512xf32, #tpu.memory_space<vmem>>, %arg12: memref<8x128xf32, #tpu.memory_space<vmem>>) attributes {dimension_semantics = [#tpu.dimension_semantics<parallel>], iteration_bounds = array<i64: 1>, scalar_prefetch = 0 : i64, scratch_operands = 0 : i64, tpu.core_type = #tpu.core_type<tc>, window_params = [{transform_indices = @transform_0, window_bounds = array<i64: 8, 19>}, {pipeline_mode = #tpu.pipeline_mode<synchronous>, transform_indices = @transform_1, window_bounds = array<i64: 9, 512>}, {pipeline_mode = #tpu.pipeline_mode<synchronous>, transform_indices = @transform_2, window_bounds = array<i64: 512, 256>}, {pipeline_mode = #tpu.pipeline_mode<synchronous>, transform_indices = @transform_3, window_bounds = array<i64: 256, 128>}, {pipeline_mode = #tpu.pipeline_mode<synchronous>, transform_indices = @transform_4, window_bounds = array<i64: 128, 20>}, {pipeline_mode = #tpu.pipeline_mode<synchronous>, transform_indices = @transform_5, window_bounds = array<i64: 10, 128>}, {pipeline_mode = #tpu.pipeline_mode<synchronous>, transform_indices = @transform_6, window_bounds = array<i64: 2, 128>}, {pipeline_mode = #tpu.pipeline_mode<synchronous>, transform_indices = @transform_7, window_bounds = array<i64: 128, 256>}, {pipeline_mode = #tpu.pipeline_mode<synchronous>, transform_indices = @transform_8, window_bounds = array<i64: 256, 512>}, {pipeline_mode = #tpu.pipeline_mode<synchronous>, transform_indices = @transform_9, window_bounds = array<i64: 512, 7>}, {pipeline_mode = #tpu.pipeline_mode<synchronous>, transform_indices = @transform_10, window_bounds = array<i64: 8, 512>}, {transform_indices = @transform_11, window_bounds = array<i64: 8, 128>}]} {
    %c0 = arith.constant 0 : index
    %c0_0 = arith.constant 0 : index
    %0 = vector.load %arg1[%c0, %c0_0] : memref<8x19xf32, #tpu.memory_space<vmem>>, vector<8x19xf32>
    %1 = vector.extract_strided_slice %0 {offsets = [0, 0], sizes = [8, 9], strides = [1, 1]} : vector<8x19xf32> to vector<8x9xf32>
    %2 = arith.truncf %1 : vector<8x9xf32> to vector<8x9xbf16>
    %3 = vector.extract_strided_slice %0 {offsets = [0, 7], sizes = [8, 2], strides = [1, 1]} : vector<8x19xf32> to vector<8x2xf32>
    %4 = arith.truncf %3 : vector<8x2xf32> to vector<8x2xbf16>
    %5 = vector.extract_strided_slice %0 {offsets = [0, 9], sizes = [8, 10], strides = [1, 1]} : vector<8x19xf32> to vector<8x10xf32>
    %c0_1 = arith.constant 0 : index
    %c0_2 = arith.constant 0 : index
    %6 = vector.load %arg2[%c0_1, %c0_2] : memref<9x512xbf16, #tpu.memory_space<vmem>>, vector<9x512xbf16>
    %cst = arith.constant dense<0.000000e+00> : vector<8x512xf32>
    %7 = tpu.matmul %2, %6, %cst {dimension_numbers = #tpu.dot_dimension_numbers<[1], [0], [0], [1], [0, 0, 1, 1], [], []>} : vector<8x9xbf16>, vector<9x512xbf16>, vector<8x512xf32> -> vector<8x512xf32>
    %c0_3 = arith.constant 0 : index
    %c0_4 = arith.constant 0 : index
    %8 = vector.load %arg11[%c0_3, %c0_4] : memref<8x512xf32, #tpu.memory_space<vmem>>, vector<1x512xf32>
    %9 = vector.broadcast %8 : vector<1x512xf32> to vector<8x512xf32>
    %10 = arith.addf %7, %9 : vector<8x512xf32>
    %cst_5 = arith.constant 0.000000e+00 : f32
    %11 = vector.broadcast %cst_5 : f32 to vector<8x512xf32>
    %12 = arith.maximumf %10, %11 : vector<8x512xf32>
    %13 = arith.truncf %12 : vector<8x512xf32> to vector<8x512xbf16>
    %c0_6 = arith.constant 0 : index
    %c0_7 = arith.constant 0 : index
    %14 = vector.load %arg3[%c0_6, %c0_7] : memref<512x256xbf16, #tpu.memory_space<vmem>>, vector<512x256xbf16>
    %cst_8 = arith.constant dense<0.000000e+00> : vector<8x256xf32>
    %15 = tpu.matmul %13, %14, %cst_8 {dimension_numbers = #tpu.dot_dimension_numbers<[1], [0], [0], [1], [0, 0, 1, 1], [], []>} : vector<8x512xbf16>, vector<512x256xbf16>, vector<8x256xf32> -> vector<8x256xf32>
    %c1 = arith.constant 1 : index
    %c0_9 = arith.constant 0 : index
    %16 = vector.load %arg11[%c1, %c0_9] : memref<8x512xf32, #tpu.memory_space<vmem>>, vector<1x256xf32>
    %17 = vector.broadcast %16 : vector<1x256xf32> to vector<8x256xf32>
    %18 = arith.addf %15, %17 : vector<8x256xf32>
    %cst_10 = arith.constant 0.000000e+00 : f32
    %19 = vector.broadcast %cst_10 : f32 to vector<8x256xf32>
    %20 = arith.maximumf %18, %19 : vector<8x256xf32>
    %21 = arith.truncf %20 : vector<8x256xf32> to vector<8x256xbf16>
    %c0_11 = arith.constant 0 : index
    %c0_12 = arith.constant 0 : index
    %22 = vector.load %arg4[%c0_11, %c0_12] : memref<256x128xbf16, #tpu.memory_space<vmem>>, vector<256x128xbf16>
    %cst_13 = arith.constant dense<0.000000e+00> : vector<8x128xf32>
    %23 = tpu.matmul %21, %22, %cst_13 {dimension_numbers = #tpu.dot_dimension_numbers<[1], [0], [0], [1], [0, 0, 1, 1], [], []>} : vector<8x256xbf16>, vector<256x128xbf16>, vector<8x128xf32> -> vector<8x128xf32>
    %c2 = arith.constant 2 : index
    %c0_14 = arith.constant 0 : index
    %24 = vector.load %arg11[%c2, %c0_14] : memref<8x512xf32, #tpu.memory_space<vmem>>, vector<1x128xf32>
    %25 = vector.broadcast %24 : vector<1x128xf32> to vector<8x128xf32>
    %26 = arith.addf %23, %25 : vector<8x128xf32>
    %cst_15 = arith.constant 0.000000e+00 : f32
    %27 = vector.broadcast %cst_15 : f32 to vector<8x128xf32>
    %28 = arith.maximumf %26, %27 : vector<8x128xf32>
    %29 = arith.truncf %28 : vector<8x128xf32> to vector<8x128xbf16>
    %c0_16 = arith.constant 0 : index
    %c0_17 = arith.constant 0 : index
    %30 = vector.load %arg5[%c0_16, %c0_17] : memref<128x20xbf16, #tpu.memory_space<vmem>>, vector<128x20xbf16>
    %cst_18 = arith.constant dense<0.000000e+00> : vector<8x20xf32>
    %31 = tpu.matmul %29, %30, %cst_18 {dimension_numbers = #tpu.dot_dimension_numbers<[1], [0], [0], [1], [0, 0, 1, 1], [], []>} : vector<8x128xbf16>, vector<128x20xbf16>, vector<8x20xf32> -> vector<8x20xf32>
    %c3 = arith.constant 3 : index
    %c0_19 = arith.constant 0 : index
    %32 = vector.load %arg11[%c3, %c0_19] : memref<8x512xf32, #tpu.memory_space<vmem>>, vector<1x20xf32>
    %33 = vector.broadcast %32 : vector<1x20xf32> to vector<8x20xf32>
    %34 = arith.addf %31, %33 : vector<8x20xf32>
    %35 = vector.extract_strided_slice %34 {offsets = [0, 0], sizes = [8, 10], strides = [1, 1]} : vector<8x20xf32> to vector<8x10xf32>
    %36 = vector.extract_strided_slice %34 {offsets = [0, 10], sizes = [8, 10], strides = [1, 1]} : vector<8x20xf32> to vector<8x10xf32>
    %cst_20 = arith.constant 5.000000e-01 : f32
    %37 = vector.broadcast %cst_20 : f32 to vector<8x10xf32>
    %38 = arith.mulf %37, %36 : vector<8x10xf32>
    %39 = math.exp %38 : vector<8x10xf32>
    %40 = arith.mulf %5, %39 : vector<8x10xf32>
    %41 = arith.addf %35, %40 : vector<8x10xf32>
    %42 = arith.truncf %41 : vector<8x10xf32> to vector<8x10xbf16>
    %c0_21 = arith.constant 0 : index
    %c0_22 = arith.constant 0 : index
    %43 = vector.load %arg6[%c0_21, %c0_22] : memref<10x128xbf16, #tpu.memory_space<vmem>>, vector<10x128xbf16>
    %cst_23 = arith.constant dense<0.000000e+00> : vector<8x128xf32>
    %44 = tpu.matmul %42, %43, %cst_23 {dimension_numbers = #tpu.dot_dimension_numbers<[1], [0], [0], [1], [0, 0, 1, 1], [], []>} : vector<8x10xbf16>, vector<10x128xbf16>, vector<8x128xf32> -> vector<8x128xf32>
    %c0_24 = arith.constant 0 : index
    %c0_25 = arith.constant 0 : index
    %45 = vector.load %arg7[%c0_24, %c0_25] : memref<2x128xbf16, #tpu.memory_space<vmem>>, vector<2x128xbf16>
    %cst_26 = arith.constant dense<0.000000e+00> : vector<8x128xf32>
    %46 = tpu.matmul %4, %45, %cst_26 {dimension_numbers = #tpu.dot_dimension_numbers<[1], [0], [0], [1], [0, 0, 1, 1], [], []>} : vector<8x2xbf16>, vector<2x128xbf16>, vector<8x128xf32> -> vector<8x128xf32>
    %47 = arith.addf %44, %46 : vector<8x128xf32>
    %c4 = arith.constant 4 : index
    %c0_27 = arith.constant 0 : index
    %48 = vector.load %arg11[%c4, %c0_27] : memref<8x512xf32, #tpu.memory_space<vmem>>, vector<1x128xf32>
    %49 = vector.broadcast %48 : vector<1x128xf32> to vector<8x128xf32>
    %50 = arith.addf %47, %49 : vector<8x128xf32>
    %cst_28 = arith.constant 0.000000e+00 : f32
    %51 = vector.broadcast %cst_28 : f32 to vector<8x128xf32>
    %52 = arith.maximumf %50, %51 : vector<8x128xf32>
    %53 = arith.truncf %52 : vector<8x128xf32> to vector<8x128xbf16>
    %c0_29 = arith.constant 0 : index
    %c0_30 = arith.constant 0 : index
    %54 = vector.load %arg8[%c0_29, %c0_30] : memref<128x256xbf16, #tpu.memory_space<vmem>>, vector<128x256xbf16>
    %cst_31 = arith.constant dense<0.000000e+00> : vector<8x256xf32>
    %55 = tpu.matmul %53, %54, %cst_31 {dimension_numbers = #tpu.dot_dimension_numbers<[1], [0], [0], [1], [0, 0, 1, 1], [], []>} : vector<8x128xbf16>, vector<128x256xbf16>, vector<8x256xf32> -> vector<8x256xf32>
    %c5 = arith.constant 5 : index
    %c0_32 = arith.constant 0 : index
    %56 = vector.load %arg11[%c5, %c0_32] : memref<8x512xf32, #tpu.memory_space<vmem>>, vector<1x256xf32>
    %57 = vector.broadcast %56 : vector<1x256xf32> to vector<8x256xf32>
    %58 = arith.addf %55, %57 : vector<8x256xf32>
    %cst_33 = arith.constant 0.000000e+00 : f32
    %59 = vector.broadcast %cst_33 : f32 to vector<8x256xf32>
    %60 = arith.maximumf %58, %59 : vector<8x256xf32>
    %61 = arith.truncf %60 : vector<8x256xf32> to vector<8x256xbf16>
    %c0_34 = arith.constant 0 : index
    %c0_35 = arith.constant 0 : index
    %62 = vector.load %arg9[%c0_34, %c0_35] : memref<256x512xbf16, #tpu.memory_space<vmem>>, vector<256x512xbf16>
    %cst_36 = arith.constant dense<0.000000e+00> : vector<8x512xf32>
    %63 = tpu.matmul %61, %62, %cst_36 {dimension_numbers = #tpu.dot_dimension_numbers<[1], [0], [0], [1], [0, 0, 1, 1], [], []>} : vector<8x256xbf16>, vector<256x512xbf16>, vector<8x512xf32> -> vector<8x512xf32>
    %c6 = arith.constant 6 : index
    %c0_37 = arith.constant 0 : index
    %64 = vector.load %arg11[%c6, %c0_37] : memref<8x512xf32, #tpu.memory_space<vmem>>, vector<1x512xf32>
    %65 = vector.broadcast %64 : vector<1x512xf32> to vector<8x512xf32>
    %66 = arith.addf %63, %65 : vector<8x512xf32>
    %cst_38 = arith.constant 0.000000e+00 : f32
    %67 = vector.broadcast %cst_38 : f32 to vector<8x512xf32>
    %68 = arith.maximumf %66, %67 : vector<8x512xf32>
    %69 = arith.truncf %68 : vector<8x512xf32> to vector<8x512xbf16>
    %c0_39 = arith.constant 0 : index
    %c0_40 = arith.constant 0 : index
    %70 = vector.load %arg10[%c0_39, %c0_40] : memref<512x7xbf16, #tpu.memory_space<vmem>>, vector<512x7xbf16>
    %cst_41 = arith.constant dense<0.000000e+00> : vector<8x7xf32>
    %71 = tpu.matmul %69, %70, %cst_41 {dimension_numbers = #tpu.dot_dimension_numbers<[1], [0], [0], [1], [0, 0, 1, 1], [], []>} : vector<8x512xbf16>, vector<512x7xbf16>, vector<8x7xf32> -> vector<8x7xf32>
    %c7 = arith.constant 7 : index
    %c0_42 = arith.constant 0 : index
    %72 = vector.load %arg11[%c7, %c0_42] : memref<8x512xf32, #tpu.memory_space<vmem>>, vector<1x7xf32>
    %73 = vector.broadcast %72 : vector<1x7xf32> to vector<8x7xf32>
    %74 = arith.addf %71, %73 : vector<8x7xf32>
    %75 = arith.negf %74 : vector<8x7xf32>
    %76 = math.exp %75 : vector<8x7xf32>
    %cst_43 = arith.constant 1.000000e+00 : f32
    %77 = vector.broadcast %cst_43 : f32 to vector<8x7xf32>
    %78 = arith.addf %77, %76 : vector<8x7xf32>
    %79 = arith.divf %77, %78 : vector<8x7xf32>
    %cst_44 = arith.constant 0.000000e+00 : f32
    %80 = vector.broadcast %cst_44 : f32 to vector<8x128xf32>
    %c0_45 = arith.constant 0 : index
    %c0_46 = arith.constant 0 : index
    %81 = vector.load %arg12[%c0_45, %c0_46] : memref<8x128xf32, #tpu.memory_space<vmem>>, vector<8x128xf32>
    tpu.vector_store %arg12[%c0_45, %c0_46], %80 {strides = array<i32>} : memref<8x128xf32, #tpu.memory_space<vmem>>, vector<8x128xf32>,
    %c0_47 = arith.constant 0 : index
    %c0_48 = arith.constant 0 : index
    %82 = vector.load %arg12[%c0_47, %c0_48] : memref<8x128xf32, #tpu.memory_space<vmem>>, vector<8x20xf32>
    tpu.vector_store %arg12[%c0_47, %c0_48], %34 {strides = array<i32>} : memref<8x128xf32, #tpu.memory_space<vmem>>, vector<8x20xf32>,
    %c0_49 = arith.constant 0 : index
    %c32 = arith.constant 32 : index
    %83 = vector.load %arg12[%c0_49, %c32] : memref<8x128xf32, #tpu.memory_space<vmem>>, vector<8x7xf32>
    tpu.vector_store %arg12[%c0_49, %c32], %79 {strides = array<i32>} : memref<8x128xf32, #tpu.memory_space<vmem>>, vector<8x7xf32>,
    return
  }
  func.func @transform_0(%arg0: i32) -> (i32, i32) {
    %c0_i32 = arith.constant 0 : i32
    %c0_i32_0 = arith.constant 0 : i32
    return %arg0, %c0_i32 : i32, i32
  }
  func.func @transform_1(%arg0: i32) -> (i32, i32) {
    %c0_i32 = arith.constant 0 : i32
    %c0_i32_0 = arith.constant 0 : i32
    %c0_i32_1 = arith.constant 0 : i32
    return %c0_i32, %c0_i32_0 : i32, i32
  }
  func.func @transform_2(%arg0: i32) -> (i32, i32) {
    %c0_i32 = arith.constant 0 : i32
    %c0_i32_0 = arith.constant 0 : i32
    %c0_i32_1 = arith.constant 0 : i32
    return %c0_i32, %c0_i32_0 : i32, i32
  }
  func.func @transform_3(%arg0: i32) -> (i32, i32) {
    %c0_i32 = arith.constant 0 : i32
    %c0_i32_0 = arith.constant 0 : i32
    %c0_i32_1 = arith.constant 0 : i32
    return %c0_i32, %c0_i32_0 : i32, i32
  }
  func.func @transform_4(%arg0: i32) -> (i32, i32) {
    %c0_i32 = arith.constant 0 : i32
    %c0_i32_0 = arith.constant 0 : i32
    %c0_i32_1 = arith.constant 0 : i32
    return %c0_i32, %c0_i32_0 : i32, i32
  }
  func.func @transform_5(%arg0: i32) -> (i32, i32) {
    %c0_i32 = arith.constant 0 : i32
    %c0_i32_0 = arith.constant 0 : i32
    %c0_i32_1 = arith.constant 0 : i32
    return %c0_i32, %c0_i32_0 : i32, i32
  }
  func.func @transform_6(%arg0: i32) -> (i32, i32) {
    %c0_i32 = arith.constant 0 : i32
    %c0_i32_0 = arith.constant 0 : i32
    %c0_i32_1 = arith.constant 0 : i32
    return %c0_i32, %c0_i32_0 : i32, i32
  }
  func.func @transform_7(%arg0: i32) -> (i32, i32) {
    %c0_i32 = arith.constant 0 : i32
    %c0_i32_0 = arith.constant 0 : i32
    %c0_i32_1 = arith.constant 0 : i32
    return %c0_i32, %c0_i32_0 : i32, i32
  }
  func.func @transform_8(%arg0: i32) -> (i32, i32) {
    %c0_i32 = arith.constant 0 : i32
    %c0_i32_0 = arith.constant 0 : i32
    %c0_i32_1 = arith.constant 0 : i32
    return %c0_i32, %c0_i32_0 : i32, i32
  }
  func.func @transform_9(%arg0: i32) -> (i32, i32) {
    %c0_i32 = arith.constant 0 : i32
    %c0_i32_0 = arith.constant 0 : i32
    %c0_i32_1 = arith.constant 0 : i32
    return %c0_i32, %c0_i32_0 : i32, i32
  }
  func.func @transform_10(%arg0: i32) -> (i32, i32) {
    %c0_i32 = arith.constant 0 : i32
    %c0_i32_0 = arith.constant 0 : i32
    %c0_i32_1 = arith.constant 0 : i32
    return %c0_i32, %c0_i32_0 : i32, i32
  }
  func.func @transform_11(%arg0: i32) -> (i32, i32) {
    %c0_i32 = arith.constant 0 : i32
    %c0_i32_0 = arith.constant 0 : i32
    return %arg0, %c0_i32 : i32, i32
  }
}

</mosaic_0001>

<llo_original>
// kernel: cvae_forward.1
$region0: #{cvae_forward.1}
  #allocation0 [shape = 'u32[]', space=smem, size = 0x4, offset = 0x4, fixed_abs, tag = 'smem constant byte address 0x4 - core index']
  #allocation1 [shape = 'u32[144,128]{1,0:T(1,128)}', space=vmem, size = 0x12000, scoped, tag = 'internal scratch']
  %s0 = inlined_call_operand.vmem [shape: f32[8,19], index: 0, kind: input, shape index: {}]
  %s1 = inlined_call_operand.vmem [shape: bf16[9,512], index: 1, kind: input, shape index: {}]
  %s2 = inlined_call_operand.hbm [shape: bf16[512,256], index: 2, kind: input, shape index: {}]
  %s3 = inlined_call_operand.vmem [shape: bf16[256,128], index: 3, kind: input, shape index: {}]
  %s4 = inlined_call_operand.vmem [shape: bf16[128,20], index: 4, kind: input, shape index: {}]
  %s5 = inlined_call_operand.vmem [shape: bf16[10,128], index: 5, kind: input, shape index: {}]
  %s6 = inlined_call_operand.vmem [shape: bf16[2,128], index: 6, kind: input, shape index: {}]
  %s7 = inlined_call_operand.vmem [shape: bf16[128,256], index: 7, kind: input, shape index: {}]
  %s8 = inlined_call_operand.hbm [shape: bf16[256,512], index: 8, kind: input, shape index: {}]
  %s9 = inlined_call_operand.vmem [shape: bf16[512,7], index: 9, kind: input, shape index: {}]
  %s10 = inlined_call_operand.vmem [shape: f32[8,512], index: 10, kind: input, shape index: {}]
  %s11 = inlined_call_operand.vmem [shape: f32[8,128], index: 11, kind: output, shape index: {}]
  %s12 = sld [smem:[#allocation0]]
  $region62: #{cvae_forward.1} parent=0
    _
  %s14 = ssub.s32 1, %s12
  %s15 = scalar_select 0, %s14, %s12
  $region1: #{cvae_forward.1} parent=0
    #allocation2 [shape = 'u8[262144]{0}', space=vmem, size = 0x40000, scoped, tag = 'input window, operand 2, single buffered']
    #allocation3 [shape = 's32[1]{0}', space=sflag, size = 0x4, scoped, tag = 'scoped memory for cvae_forward.1']
    #allocation4 [shape = 'u8[262144]{0}', space=vmem, size = 0x40000, scoped, tag = 'input window, operand 8, single buffered']
    #allocation5 [shape = 's32[1]{0}', space=sflag, size = 0x4, scoped, tag = 'scoped memory for cvae_forward.1']
    %16 = vsyncpa [#allocation3], 0
    %17 = vsyncpa [#allocation5], 0
    // Predicated region
    $region2: #{cvae_forward.1} parent=1 // pred_check
      _
    $region3: #{cvae_forward.1} parent=1 // pred_check_branch
      %19 = sbr.rel (0) target = $region5
    $region4: #{cvae_forward.1} parent=1 // pred_region
      _
    $region5: #{cvae_forward.1} parent=1 // pred_fallthru
      _
    // Predicated region
    $region6: #{cvae_forward.1} parent=1 // pred_check
      _
    $region7: #{cvae_forward.1} parent=1 // pred_check_branch
      %21 = sbr.rel (0) target = $region9
    $region8: #{cvae_forward.1} parent=1 // pred_region
      _
    $region9: #{cvae_forward.1} parent=1 // pred_fallthru
      _
    // Predicated region
    $region10: #{cvae_forward.1} parent=1 // pred_check
      _
    $region11: #{cvae_forward.1} parent=1 // pred_check_branch
      %23 = sbr.rel (0) target = $region13
    $region12: #{cvae_forward.1} parent=1 // pred_region
      %s25 = ssub.s32 8192, 8192
      %26 = vsyncadd [#allocation3], %s25
      %s27 = sshll.u32 [#allocation2], 4
      %s28 = int_to_ptr.vmem [resolvable:$true] %s27
      %33 = dma.hbm_to_vmem [thread:$0]  %s2, 8192, %s28, [#allocation3], 128, 128, 8
    $region13: #{cvae_forward.1} parent=1 // pred_fallthru
      _
    // Predicated region
    $region14: #{cvae_forward.1} parent=1 // pred_check
      _
    $region15: #{cvae_forward.1} parent=1 // pred_check_branch
      %35 = sbr.rel (0) target = $region17
    $region16: #{cvae_forward.1} parent=1 // pred_region
      _
    $region17: #{cvae_forward.1} parent=1 // pred_fallthru
      _
    // Predicated region
    $region18: #{cvae_forward.1} parent=1 // pred_check
      _
    $region19: #{cvae_forward.1} parent=1 // pred_check_branch
      %37 = sbr.rel (0) target = $region21
    $region20: #{cvae_forward.1} parent=1 // pred_region
      _
    $region21: #{cvae_forward.1} parent=1 // pred_fallthru
      _
    // Predicated region
    $region22: #{cvae_forward.1} parent=1 // pred_check
      _
    $region23: #{cvae_forward.1} parent=1 // pred_check_branch
      %39 = sbr.rel (0) target = $region25
    $region24: #{cvae_forward.1} parent=1 // pred_region
      _
    $region25: #{cvae_forward.1} parent=1 // pred_fallthru
      _
    // Predicated region
    $region26: #{cvae_forward.1} parent=1 // pred_check
      _
    $region27: #{cvae_forward.1} parent=1 // pred_check_branch
      %41 = sbr.rel (0) target = $region29
    $region28: #{cvae_forward.1} parent=1 // pred_region
      _
    $region29: #{cvae_forward.1} parent=1 // pred_fallthru
      _
    // Predicated region
    $region30: #{cvae_forward.1} parent=1 // pred_check
      _
    $region31: #{cvae_forward.1} parent=1 // pred_check_branch
      %43 = sbr.rel (0) target = $region33
    $region32: #{cvae_forward.1} parent=1 // pred_region
      _
    $region33: #{cvae_forward.1} parent=1 // pred_fallthru
      _
    // Predicated region
    $region34: #{cvae_forward.1} parent=1 // pred_check
      _
    $region35: #{cvae_forward.1} parent=1 // pred_check_branch
      %45 = sbr.rel (0) target = $region37
    $region36: #{cvae_forward.1} parent=1 // pred_region
      %s47 = ssub.s32 8192, 8192
      %48 = vsyncadd [#allocation5], %s47
      %s49 = sshll.u32 [#allocation4], 4
      %s50 = int_to_ptr.vmem [resolvable:$true] %s49
      %55 = dma.hbm_to_vmem [thread:$0]  %s8, 8192, %s50, [#allocation5], 256, 256, 16
    $region37: #{cvae_forward.1} parent=1 // pred_fallthru
      _
    // Predicated region
    $region38: #{cvae_forward.1} parent=1 // pred_check
      _
    $region39: #{cvae_forward.1} parent=1 // pred_check_branch
      %57 = sbr.rel (0) target = $region41
    $region40: #{cvae_forward.1} parent=1 // pred_region
      _
    $region41: #{cvae_forward.1} parent=1 // pred_fallthru
      _
    // Predicated region
    $region42: #{cvae_forward.1} parent=1 // pred_check
      _
    $region43: #{cvae_forward.1} parent=1 // pred_check_branch
      %59 = sbr.rel (0) target = $region45
    $region44: #{cvae_forward.1} parent=1 // pred_region
      _
    $region45: #{cvae_forward.1} parent=1 // pred_fallthru
      _
    // Predicated region
    $region46: #{cvae_forward.1} parent=1 // pred_check
      _
    $region47: #{cvae_forward.1} parent=1 // pred_check_branch
      %61 = sbr.rel (0) target = $region49
    $region48: #{cvae_forward.1} parent=1 // pred_region
      %62 = dma.done [#allocation3], 8192
    $region49: #{cvae_forward.1} parent=1 // pred_fallthru
      _
    // Predicated region
    $region50: #{cvae_forward.1} parent=1 // pred_check
      _
    $region51: #{cvae_forward.1} parent=1 // pred_check_branch
      %64 = sbr.rel (0) target = $region53
    $region52: #{cvae_forward.1} parent=1 // pred_region
      %65 = dma.done [#allocation5], 8192
    $region53: #{cvae_forward.1} parent=1 // pred_fallthru
      _
    %v67 = vld [vmem:[%s0] sm:$0xff]
    %v68 = vpack.c.bf16 %v67, %v67
    %v69 = vld [vmem:[%s1] sm:$0xff]
    %v70 = vld [vmem:[%s1 + $0x8] sm:$0xff]
    %v71 = vld [vmem:[%s1 + $0x10] sm:$0x11]
    %v72 = vld [vmem:[%s1 + $0x18] sm:$0x11]
    %v73 = vld [vmem:[%s10] ss:$8 sm:$0xf]
    %v75 = vlaneseq
    %v76 = vshrl.u32 %v75, 7
    %v77 = vsub.s32 0, %v76
    %v78 = vrot.slane %v73, %v77
    %v79 = vlaneseq
    %v80 = vshrl.u32 %v79, 7
    %v81 = vsub.s32 1, %v80
    %v82 = vrot.slane %v73, %v81
    %v83 = vlaneseq
    %v84 = vshrl.u32 %v83, 7
    %v85 = vsub.s32 2, %v84
    %v86 = vrot.slane %v73, %v85
    %v87 = vlaneseq
    %v88 = vshrl.u32 %v87, 7
    %v89 = vsub.s32 3, %v88
    %v90 = vrot.slane %v73, %v89
    %v99 = vunpack.c.l.b16 %v69
    %v100 = vunpack.c.h.b16 %v69
    %v101 = vunpack.c.l.b16 %v70
    %v102 = vunpack.c.h.b16 %v70
    %v103 = vunpack.c.l.b16 %v71
    %v104 = vunpack.c.h.b16 %v71
    %v105 = vunpack.c.l.b16 %v72
    %v106 = vunpack.c.h.b16 %v72
    %v107 = vpack.c.b16 %v103, %v99
    %v108 = vpack.c.b16 %v104, %v100
    %v109 = vpack.c.b16 %v105, %v101
    %v110 = vpack.c.b16 %v106, %v102
    %vm111 = vcmask 72704
    %v113 = vsel %vm111, %v68, 0
    %vm115 = vcmask 1043456
    %vm116 = vcmask 1044480
    %v117 = vsel %vm115, 4294967295, 65535
    %v118 = vsel %vm116, %v117, 0
    %v120 = vand.u32 %v107, %v118
    %v123 = vand.u32 %v108, %v118
    %v126 = vand.u32 %v109, %v118
    %v129 = vand.u32 %v110, %v118
    %131 = vmatprep.subr.bf16.mxu0 %v123
    %132 = vmatpush1.bf16.msra.mxu0 %v120
    %133 = vmatprep.subr.bf16.mxu0 0
    %134 = vmatpush1.bf16.msra.mxu0 0
    %135 = vmatprep.subr.bf16.mxu0 0
    %136 = vmatpush1.bf16.msra.mxu0 0
    %137 = vmatprep.subr.bf16.mxu0 0
    %138 = vmatpush1.bf16.msra.mxu0 0
    %139 = vmatprep.subr.bf16.mxu0 0
    %140 = vmatpush1.bf16.msra.mxu0 0
    %141 = vmatprep.subr.bf16.mxu0 0
    %142 = vmatpush1.bf16.msra.mxu0 0
    %143 = vmatprep.subr.bf16.mxu0 0
    %144 = vmatpush1.bf16.msra.mxu0 0
    %145 = vmatprep.subr.bf16.mxu0 0
    %146 = vmatpush1.bf16.msra.mxu0 0
    %147 = vmatprep.subr.bf16.mxu0 0
    %148 = vmatpush1.bf16.msra.mxu0 0
    %149 = vmatprep.subr.bf16.mxu0 0
    %150 = vmatpush1.bf16.msra.mxu0 0
    %151 = vmatprep.subr.bf16.mxu0 0
    %152 = vmatpush1.bf16.msra.mxu0 0
    %153 = vmatprep.subr.bf16.mxu0 0
    %154 = vmatpush1.bf16.msra.mxu0 0
    %155 = vmatprep.subr.bf16.mxu0 0
    %156 = vmatpush1.bf16.msra.mxu0 0
    %157 = vmatprep.subr.bf16.mxu0 0
    %158 = vmatpush1.bf16.msra.mxu0 0
    %159 = vmatprep.subr.bf16.mxu0 0
    %160 = vmatpush1.bf16.msra.mxu0 0
    %161 = vmatprep.subr.bf16.mxu0 0
    %162 = vmatpush1.bf16.msra.mxu0 0
    %163 = vmatprep.mubr.bf16.mxu0 0
    %164 = vmatmul.mubr.bf16.gmra.mrb[0].mxu0 %v113
    %v165 = vpop.f32.mrb[0].mxu0
    %v166 = vadd.f32 %v78, %v165
    %v167 = vpop.f32.mrb[0].mxu0
    %v168 = vadd.f32 %v82, %v167
    %v169 = vpop.f32.mrb[0].mxu0
    %v170 = vpop.f32.mrb[0].mxu0
    %171 = vdwg.mxu0
    %172 = vmatprep.subr.bf16.mxu0 %v129
    %173 = vmatpush1.bf16.msra.mxu0 %v126
    %174 = vmatprep.subr.bf16.mxu0 0
    %175 = vmatpush1.bf16.msra.mxu0 0
    %176 = vmatprep.subr.bf16.mxu0 0
    %177 = vmatpush1.bf16.msra.mxu0 0
    %178 = vmatprep.subr.bf16.mxu0 0
    %179 = vmatpush1.bf16.msra.mxu0 0
    %180 = vmatprep.subr.bf16.mxu0 0
    %181 = vmatpush1.bf16.msra.mxu0 0
    %182 = vmatprep.subr.bf16.mxu0 0
    %183 = vmatpush1.bf16.msra.mxu0 0
    %184 = vmatprep.subr.bf16.mxu0 0
    %185 = vmatpush1.bf16.msra.mxu0 0
    %186 = vmatprep.subr.bf16.mxu0 0
    %187 = vmatpush1.bf16.msra.mxu0 0
    %188 = vmatprep.subr.bf16.mxu0 0
    %189 = vmatpush1.bf16.msra.mxu0 0
    %190 = vmatprep.subr.bf16.mxu0 0
    %191 = vmatpush1.bf16.msra.mxu0 0
    %192 = vmatprep.subr.bf16.mxu0 0
    %193 = vmatpush1.bf16.msra.mxu0 0
    %194 = vmatprep.subr.bf16.mxu0 0
    %195 = vmatpush1.bf16.msra.mxu0 0
    %196 = vmatprep.subr.bf16.mxu0 0
    %197 = vmatpush1.bf16.msra.mxu0 0
    %198 = vmatprep.subr.bf16.mxu0 0
    %199 = vmatpush1.bf16.msra.mxu0 0
    %200 = vmatprep.subr.bf16.mxu0 0
    %201 = vmatpush1.bf16.msra.mxu0 0
    %202 = vmatprep.subr.bf16.mxu0 0
    %203 = vmatpush1.bf16.msra.mxu0 0
    %204 = vmatprep.mubr.bf16.mxu0 0
    %205 = vmatmul.mubr.bf16.gmra.mrb[0].mxu0 %v113
    %v206 = vpop.f32.mrb[0].mxu0
    %v207 = vadd.f32 %v86, %v206
    %v208 = vpop.f32.mrb[0].mxu0
    %v209 = vadd.f32 %v90, %v208
    %v210 = vpop.f32.mrb[0].mxu0
    %v211 = vpop.f32.mrb[0].mxu0
    %212 = vdwg.mxu0
    %v213 = vmax.f32 %v166, 0.0
    %v214 = vmax.f32 %v168, 0.0
    %v215 = vmax.f32 %v207, 0.0
    %v216 = vmax.f32 %v209, 0.0
    %v217 = vpack.c.bf16 %v213, %v213
    %v218 = vpack.c.bf16 %v214, %v214
    %v219 = vpack.c.bf16 %v215, %v215
    %v220 = vpack.c.bf16 %v216, %v216
    %v221 = vld [vmem:[#allocation2] sm:$0xff]
    %v222 = vld [vmem:[#allocation2 + $0x8] sm:$0xff]
    %v223 = vld [vmem:[#allocation2 + $0x10] sm:$0xff]
    %v224 = vld [vmem:[#allocation2 + $0x18] sm:$0xff]
    %v225 = vld [vmem:[#allocation2 + $0x20] sm:$0xff]
    %v226 = vld [vmem:[#allocation2 + $0x28] sm:$0xff]
    %v227 = vld [vmem:[#allocation2 + $0x30] sm:$0xff]
    %v228 = vld [vmem:[#allocation2 + $0x38] sm:$0xff]
    %v229 = vld [vmem:[#allocation2 + $0x40] sm:$0xff]
    %v230 = vld [vmem:[#allocation2 + $0x48] sm:$0xff]
    %v231 = vld [vmem:[#allocation2 + $0x50] sm:$0xff]
    %v232 = vld [vmem:[#allocation2 + $0x58] sm:$0xff]
    %v233 = vld [vmem:[#allocation2 + $0x60] sm:$0xff]
    %v234 = vld [vmem:[#allocation2 + $0x68] sm:$0xff]
    %v235 = vld [vmem:[#allocation2 + $0x70] sm:$0xff]
    %v236 = vld [vmem:[#allocation2 + $0x78] sm:$0xff]
    %v237 = vld [vmem:[#allocation2 + $0x80] sm:$0xff]
    %v238 = vld [vmem:[#allocation2 + $0x88] sm:$0xff]
    %v239 = vld [vmem:[#allocation2 + $0x90] sm:$0xff]
    %v240 = vld [vmem:[#allocation2 + $0x98] sm:$0xff]
    %v241 = vld [vmem:[#allocation2 + $0xa0] sm:$0xff]
    %v242 = vld [vmem:[#allocation2 + $0xa8] sm:$0xff]
    %v243 = vld [vmem:[#allocation2 + $0xb0] sm:$0xff]
    %v244 = vld [vmem:[#allocation2 + $0xb8] sm:$0xff]
    %v245 = vld [vmem:[#allocation2 + $0xc0] sm:$0xff]
    %v246 = vld [vmem:[#allocation2 + $0xc8] sm:$0xff]
    %v247 = vld [vmem:[#allocation2 + $0xd0] sm:$0xff]
    %v248 = vld [vmem:[#allocation2 + $0xd8] sm:$0xff]
    %v249 = vld [vmem:[#allocation2 + $0xe0] sm:$0xff]
    %v250 = vld [vmem:[#allocation2 + $0xe8] sm:$0xff]
    %v251 = vld [vmem:[#allocation2 + $0xf0] sm:$0xff]
    %v252 = vld [vmem:[#allocation2 + $0xf8] sm:$0xff]
    %v253 = vld [vmem:[#allocation2 + $0x100] sm:$0xff]
    %v254 = vld [vmem:[#allocation2 + $0x108] sm:$0xff]
    %v255 = vld [vmem:[#allocation2 + $0x110] sm:$0xff]
    %v256 = vld [vmem:[#allocation2 + $0x118] sm:$0xff]
    %v257 = vld [vmem:[#allocation2 + $0x120] sm:$0xff]
    %v258 = vld [vmem:[#allocation2 + $0x128] sm:$0xff]
    %v259 = vld [vmem:[#allocation2 + $0x130] sm:$0xff]
    %v260 = vld [vmem:[#allocation2 + $0x138] sm:$0xff]
    %v261 = vld [vmem:[#allocation2 + $0x140] sm:$0xff]
    %v262 = vld [vmem:[#allocation2 + $0x148] sm:$0xff]
    %v263 = vld [vmem:[#allocation2 + $0x150] sm:$0xff]
    %v264 = vld [vmem:[#allocation2 + $0x158] sm:$0xff]
    %v265 = vld [vmem:[#allocation2 + $0x160] sm:$0xff]
    %v266 = vld [vmem:[#allocation2 + $0x168] sm:$0xff]
    %v267 = vld [vmem:[#allocation2 + $0x170] sm:$0xff]
    %v268 = vld [vmem:[#allocation2 + $0x178] sm:$0xff]
    %v269 = vld [vmem:[#allocation2 + $0x180] sm:$0xff]
    %v270 = vld [vmem:[#allocation2 + $0x188] sm:$0xff]
    %v271 = vld [vmem:[#allocation2 + $0x190] sm:$0xff]
    %v272 = vld [vmem:[#allocation2 + $0x198] sm:$0xff]
    %v273 = vld [vmem:[#allocation2 + $0x1a0] sm:$0xff]
    %v274 = vld [vmem:[#allocation2 + $0x1a8] sm:$0xff]
    %v275 = vld [vmem:[#allocation2 + $0x1b0] sm:$0xff]
    %v276 = vld [vmem:[#allocation2 + $0x1b8] sm:$0xff]
    %v277 = vld [vmem:[#allocation2 + $0x1c0] sm:$0xff]
    %v278 = vld [vmem:[#allocation2 + $0x1c8] sm:$0xff]
    %v279 = vld [vmem:[#allocation2 + $0x1d0] sm:$0xff]
    %v280 = vld [vmem:[#allocation2 + $0x1d8] sm:$0xff]
    %v281 = vld [vmem:[#allocation2 + $0x1e0] sm:$0xff]
    %v282 = vld [vmem:[#allocation2 + $0x1e8] sm:$0xff]
    %v283 = vld [vmem:[#allocation2 + $0x1f0] sm:$0xff]
    %v284 = vld [vmem:[#allocation2 + $0x1f8] sm:$0xff]
    %s285 = scalar_lea.vmem %s10, 1
    %v286 = vld [vmem:[%s285] ss:$8 sm:$0x3]
    %v288 = vlaneseq
    %v289 = vshrl.u32 %v288, 7
    %v290 = vsub.s32 0, %v289
    %v291 = vrot.slane %v286, %v290
    %v292 = vlaneseq
    %v293 = vshrl.u32 %v292, 7
    %v294 = vsub.s32 1, %v293
    %v295 = vrot.slane %v286, %v294
    %v362 = vunpack.c.l.b16 %v221
    %v363 = vunpack.c.h.b16 %v221
    %v364 = vunpack.c.l.b16 %v222
    %v365 = vunpack.c.h.b16 %v222
    %v366 = vunpack.c.l.b16 %v223
    %v367 = vunpack.c.h.b16 %v223
    %v368 = vunpack.c.l.b16 %v224
    %v369 = vunpack.c.h.b16 %v224
    %v370 = vunpack.c.l.b16 %v225
    %v371 = vunpack.c.h.b16 %v225
    %v372 = vunpack.c.l.b16 %v226
    %v373 = vunpack.c.h.b16 %v226
    %v374 = vunpack.c.l.b16 %v227
    %v375 = vunpack.c.h.b16 %v227
    %v376 = vunpack.c.l.b16 %v228
    %v377 = vunpack.c.h.b16 %v228
    %v378 = vunpack.c.l.b16 %v229
    %v379 = vunpack.c.h.b16 %v229
    %v380 = vunpack.c.l.b16 %v230
    %v381 = vunpack.c.h.b16 %v230
    %v382 = vunpack.c.l.b16 %v231
    %v383 = vunpack.c.h.b16 %v231
    %v384 = vunpack.c.l.b16 %v232
    %v385 = vunpack.c.h.b16 %v232
    %v386 = vunpack.c.l.b16 %v233
    %v387 = vunpack.c.h.b16 %v233
    %v388 = vunpack.c.l.b16 %v234
    %v389 = vunpack.c.h.b16 %v234
    %v390 = vunpack.c.l.b16 %v235
    %v391 = vunpack.c.h.b16 %v235
    %v392 = vunpack.c.l.b16 %v236
    %v393 = vunpack.c.h.b16 %v236
    %v394 = vunpack.c.l.b16 %v237
    %v395 = vunpack.c.h.b16 %v237
    %v396 = vunpack.c.l.b16 %v238
    %v397 = vunpack.c.h.b16 %v238
    %v398 = vunpack.c.l.b16 %v239
    %v399 = vunpack.c.h.b16 %v239
    %v400 = vunpack.c.l.b16 %v240
    %v401 = vunpack.c.h.b16 %v240
    %v402 = vunpack.c.l.b16 %v241
    %v403 = vunpack.c.h.b16 %v241
    %v404 = vunpack.c.l.b16 %v242
    %v405 = vunpack.c.h.b16 %v242
    %v406 = vunpack.c.l.b16 %v243
    %v407 = vunpack.c.h.b16 %v243
    %v408 = vunpack.c.l.b16 %v244
    %v409 = vunpack.c.h.b16 %v244
    %v410 = vunpack.c.l.b16 %v245
    %v411 = vunpack.c.h.b16 %v245
    %v412 = vunpack.c.l.b16 %v246
    %v413 = vunpack.c.h.b16 %v246
    %v414 = vunpack.c.l.b16 %v247
    %v415 = vunpack.c.h.b16 %v247
    %v416 = vunpack.c.l.b16 %v248
    %v417 = vunpack.c.h.b16 %v248
    %v418 = vunpack.c.l.b16 %v249
    %v419 = vunpack.c.h.b16 %v249
    %v420 = vunpack.c.l.b16 %v250
    %v421 = vunpack.c.h.b16 %v250
    %v422 = vunpack.c.l.b16 %v251
    %v423 = vunpack.c.h.b16 %v251
    %v424 = vunpack.c.l.b16 %v252
    %v425 = vunpack.c.h.b16 %v252
    %v426 = vunpack.c.l.b16 %v253
    %v427 = vunpack.c.h.b16 %v253
    %v428 = vunpack.c.l.b16 %v254
    %v429 = vunpack.c.h.b16 %v254
    %v430 = vunpack.c.l.b16 %v255
    %v431 = vunpack.c.h.b16 %v255
    %v432 = vunpack.c.l.b16 %v256
    %v433 = vunpack.c.h.b16 %v256
    %v434 = vunpack.c.l.b16 %v257
    %v435 = vunpack.c.h.b16 %v257
    %v436 = vunpack.c.l.b16 %v258
    %v437 = vunpack.c.h.b16 %v258
    %v438 = vunpack.c.l.b16 %v259
    %v439 = vunpack.c.h.b16 %v259
    %v440 = vunpack.c.l.b16 %v260
    %v441 = vunpack.c.h.b16 %v260
    %v442 = vunpack.c.l.b16 %v261
    %v443 = vunpack.c.h.b16 %v261
    %v444 = vunpack.c.l.b16 %v262
    %v445 = vunpack.c.h.b16 %v262
    %v446 = vunpack.c.l.b16 %v263
    %v447 = vunpack.c.h.b16 %v263
    %v448 = vunpack.c.l.b16 %v264
    %v449 = vunpack.c.h.b16 %v264
    %v450 = vunpack.c.l.b16 %v265
    %v451 = vunpack.c.h.b16 %v265
    %v452 = vunpack.c.l.b16 %v266
    %v453 = vunpack.c.h.b16 %v266
    %v454 = vunpack.c.l.b16 %v267
    %v455 = vunpack.c.h.b16 %v267
    %v456 = vunpack.c.l.b16 %v268
    %v457 = vunpack.c.h.b16 %v268
    %v458 = vunpack.c.l.b16 %v269
    %v459 = vunpack.c.h.b16 %v269
    %v460 = vunpack.c.l.b16 %v270
    %v461 = vunpack.c.h.b16 %v270
    %v462 = vunpack.c.l.b16 %v271
    %v463 = vunpack.c.h.b16 %v271
    %v464 = vunpack.c.l.b16 %v272
    %v465 = vunpack.c.h.b16 %v272
    %v466 = vunpack.c.l.b16 %v273
    %v467 = vunpack.c.h.b16 %v273
    %v468 = vunpack.c.l.b16 %v274
    %v469 = vunpack.c.h.b16 %v274
    %v470 = vunpack.c.l.b16 %v275
    %v471 = vunpack.c.h.b16 %v275
    %v472 = vunpack.c.l.b16 %v276
    %v473 = vunpack.c.h.b16 %v276
    %v474 = vunpack.c.l.b16 %v277
    %v475 = vunpack.c.h.b16 %v277
    %v476 = vunpack.c.l.b16 %v278
    %v477 = vunpack.c.h.b16 %v278
    %v478 = vunpack.c.l.b16 %v279
    %v479 = vunpack.c.h.b16 %v279
    %v480 = vunpack.c.l.b16 %v280
    %v481 = vunpack.c.h.b16 %v280
    %v482 = vunpack.c.l.b16 %v281
    %v483 = vunpack.c.h.b16 %v281
    %v484 = vunpack.c.l.b16 %v282
    %v485 = vunpack.c.h.b16 %v282
    %v486 = vunpack.c.l.b16 %v283
    %v487 = vunpack.c.h.b16 %v283
    %v488 = vunpack.c.l.b16 %v284
    %v489 = vunpack.c.h.b16 %v284
    %v490 = vpack.c.b16 %v364, %v362
    %v491 = vpack.c.b16 %v365, %v363
    %v492 = vpack.c.b16 %v368, %v366
    %v493 = vpack.c.b16 %v369, %v367
    %v494 = vpack.c.b16 %v372, %v370
    %v495 = vpack.c.b16 %v373, %v371
    %v496 = vpack.c.b16 %v376, %v374
    %v497 = vpack.c.b16 %v377, %v375
    %v498 = vpack.c.b16 %v380, %v378
    %v499 = vpack.c.b16 %v381, %v379
    %v500 = vpack.c.b16 %v384, %v382
    %v501 = vpack.c.b16 %v385, %v383
    %v502 = vpack.c.b16 %v388, %v386
    %v503 = vpack.c.b16 %v389, %v387
    %v504 = vpack.c.b16 %v392, %v390
    %v505 = vpack.c.b16 %v393, %v391
    %v506 = vpack.c.b16 %v396, %v394
    %v507 = vpack.c.b16 %v397, %v395
    %v508 = vpack.c.b16 %v400, %v398
    %v509 = vpack.c.b16 %v401, %v399
    %v510 = vpack.c.b16 %v404, %v402
    %v511 = vpack.c.b16 %v405, %v403
    %v512 = vpack.c.b16 %v408, %v406
    %v513 = vpack.c.b16 %v409, %v407
    %v514 = vpack.c.b16 %v412, %v410
    %v515 = vpack.c.b16 %v413, %v411
    %v516 = vpack.c.b16 %v416, %v414
    %v517 = vpack.c.b16 %v417, %v415
    %v518 = vpack.c.b16 %v420, %v418
    %v519 = vpack.c.b16 %v421, %v419
    %v520 = vpack.c.b16 %v424, %v422
    %v521 = vpack.c.b16 %v425, %v423
    %v522 = vpack.c.b16 %v428, %v426
    %v523 = vpack.c.b16 %v429, %v427
    %v524 = vpack.c.b16 %v432, %v430
    %v525 = vpack.c.b16 %v433, %v431
    %v526 = vpack.c.b16 %v436, %v434
    %v527 = vpack.c.b16 %v437, %v435
    %v528 = vpack.c.b16 %v440, %v438
    %v529 = vpack.c.b16 %v441, %v439
    %v530 = vpack.c.b16 %v444, %v442
    %v531 = vpack.c.b16 %v445, %v443
    %v532 = vpack.c.b16 %v448, %v446
    %v533 = vpack.c.b16 %v449, %v447
    %v534 = vpack.c.b16 %v452, %v450
    %v535 = vpack.c.b16 %v453, %v451
    %v536 = vpack.c.b16 %v456, %v454
    %v537 = vpack.c.b16 %v457, %v455
    %v538 = vpack.c.b16 %v460, %v458
    %v539 = vpack.c.b16 %v461, %v459
    %v540 = vpack.c.b16 %v464, %v462
    %v541 = vpack.c.b16 %v465, %v463
    %v542 = vpack.c.b16 %v468, %v466
    %v543 = vpack.c.b16 %v469, %v467
    %v544 = vpack.c.b16 %v472, %v470
    %v545 = vpack.c.b16 %v473, %v471
    %v546 = vpack.c.b16 %v476, %v474
    %v547 = vpack.c.b16 %v477, %v475
    %v548 = vpack.c.b16 %v480, %v478
    %v549 = vpack.c.b16 %v481, %v479
    %v550 = vpack.c.b16 %v484, %v482
    %v551 = vpack.c.b16 %v485, %v483
    %v552 = vpack.c.b16 %v488, %v486
    %v553 = vpack.c.b16 %v489, %v487
    %618 = vmatprep.subr.bf16.mxu0 %v491
    %619 = vmatpush1.bf16.msra.mxu0 %v490
    %620 = vmatprep.subr.bf16.mxu0 %v493
    %621 = vmatpush1.bf16.msra.mxu0 %v492
    %622 = vmatprep.subr.bf16.mxu0 %v495
    %623 = vmatpush1.bf16.msra.mxu0 %v494
    %624 = vmatprep.subr.bf16.mxu0 %v497
    %625 = vmatpush1.bf16.msra.mxu0 %v496
    %626 = vmatprep.subr.bf16.mxu0 %v499
    %627 = vmatpush1.bf16.msra.mxu0 %v498
    %628 = vmatprep.subr.bf16.mxu0 %v501
    %629 = vmatpush1.bf16.msra.mxu0 %v500
    %630 = vmatprep.subr.bf16.mxu0 %v503
    %631 = vmatpush1.bf16.msra.mxu0 %v502
    %632 = vmatprep.subr.bf16.mxu0 %v505
    %633 = vmatpush1.bf16.msra.mxu0 %v504
    %634 = vmatprep.subr.bf16.mxu0 %v507
    %635 = vmatpush1.bf16.msra.mxu0 %v506
    %636 = vmatprep.subr.bf16.mxu0 %v509
    %637 = vmatpush1.bf16.msra.mxu0 %v508
    %638 = vmatprep.subr.bf16.mxu0 %v511
    %639 = vmatpush1.bf16.msra.mxu0 %v510
    %640 = vmatprep.subr.bf16.mxu0 %v513
    %641 = vmatpush1.bf16.msra.mxu0 %v512
    %642 = vmatprep.subr.bf16.mxu0 %v515
    %643 = vmatpush1.bf16.msra.mxu0 %v514
    %644 = vmatprep.subr.bf16.mxu0 %v517
    %645 = vmatpush1.bf16.msra.mxu0 %v516
    %646 = vmatprep.subr.bf16.mxu0 %v519
    %647 = vmatpush1.bf16.msra.mxu0 %v518
    %648 = vmatprep.subr.bf16.mxu0 %v521
    %649 = vmatpush1.bf16.msra.mxu0 %v520
    %650 = vmatprep.mubr.bf16.mxu0 %v218
    %651 = vmatmul.mubr.bf16.gmra.mrb[0].mxu0 %v217
    %v652 = vpop.f32.mrb[0].mxu0
    %v653 = vadd.f32 %v291, %v652
    %v654 = vpop.f32.mrb[0].mxu0
    %v655 = vadd.f32 %v295, %v654
    %v656 = vpop.f32.mrb[0].mxu0
    %v657 = vpop.f32.mrb[0].mxu0
    %658 = vdwg.mxu0
    %659 = vmatprep.subr.bf16.mxu0 %v523
    %660 = vmatpush1.bf16.msra.mxu0 %v522
    %661 = vmatprep.subr.bf16.mxu0 %v525
    %662 = vmatpush1.bf16.msra.mxu0 %v524
    %663 = vmatprep.subr.bf16.mxu0 %v527
    %664 = vmatpush1.bf16.msra.mxu0 %v526
    %665 = vmatprep.subr.bf16.mxu0 %v529
    %666 = vmatpush1.bf16.msra.mxu0 %v528
    %667 = vmatprep.subr.bf16.mxu0 %v531
    %668 = vmatpush1.bf16.msra.mxu0 %v530
    %669 = vmatprep.subr.bf16.mxu0 %v533
    %670 = vmatpush1.bf16.msra.mxu0 %v532
    %671 = vmatprep.subr.bf16.mxu0 %v535
    %672 = vmatpush1.bf16.msra.mxu0 %v534
    %673 = vmatprep.subr.bf16.mxu0 %v537
    %674 = vmatpush1.bf16.msra.mxu0 %v536
    %675 = vmatprep.subr.bf16.mxu0 %v539
    %676 = vmatpush1.bf16.msra.mxu0 %v538
    %677 = vmatprep.subr.bf16.mxu0 %v541
    %678 = vmatpush1.bf16.msra.mxu0 %v540
    %679 = vmatprep.subr.bf16.mxu0 %v543
    %680 = vmatpush1.bf16.msra.mxu0 %v542
    %681 = vmatprep.subr.bf16.mxu0 %v545
    %682 = vmatpush1.bf16.msra.mxu0 %v544
    %683 = vmatprep.subr.bf16.mxu0 %v547
    %684 = vmatpush1.bf16.msra.mxu0 %v546
    %685 = vmatprep.subr.bf16.mxu0 %v549
    %686 = vmatpush1.bf16.msra.mxu0 %v548
    %687 = vmatprep.subr.bf16.mxu0 %v551
    %688 = vmatpush1.bf16.msra.mxu0 %v550
    %689 = vmatprep.subr.bf16.mxu0 %v553
    %690 = vmatpush1.bf16.msra.mxu0 %v552
    %691 = vmatprep.mubr.bf16.mxu0 %v220
    %692 = vmatmul.mubr.bf16.gmra.mrb[0].mxu0 %v219
    %v693 = vpop.f32.mrb[0].mxu0
    %v694 = vadd.f32 %v653, %v693
    %v695 = vpop.f32.mrb[0].mxu0
    %v696 = vadd.f32 %v655, %v695
    %v697 = vpop.f32.mrb[0].mxu0
    %v698 = vpop.f32.mrb[0].mxu0
    %699 = vdwg.mxu0
    %v700 = vmax.f32 %v694, 0.0
    %v701 = vmax.f32 %v696, 0.0
    %v702 = vpack.c.bf16 %v700, %v700
    %v703 = vpack.c.bf16 %v701, %v701
    %v704 = vld [vmem:[%s3] sm:$0xf]
    %v705 = vld [vmem:[%s3 + $0x4] sm:$0xf]
    %v706 = vld [vmem:[%s3 + $0x8] sm:$0xf]
    %v707 = vld [vmem:[%s3 + $0xc] sm:$0xf]
    %v708 = vld [vmem:[%s3 + $0x10] sm:$0xf]
    %v709 = vld [vmem:[%s3 + $0x14] sm:$0xf]
    %v710 = vld [vmem:[%s3 + $0x18] sm:$0xf]
    %v711 = vld [vmem:[%s3 + $0x1c] sm:$0xf]
    %v712 = vld [vmem:[%s3 + $0x20] sm:$0xf]
    %v713 = vld [vmem:[%s3 + $0x24] sm:$0xf]
    %v714 = vld [vmem:[%s3 + $0x28] sm:$0xf]
    %v715 = vld [vmem:[%s3 + $0x2c] sm:$0xf]
    %v716 = vld [vmem:[%s3 + $0x30] sm:$0xf]
    %v717 = vld [vmem:[%s3 + $0x34] sm:$0xf]
    %v718 = vld [vmem:[%s3 + $0x38] sm:$0xf]
    %v719 = vld [vmem:[%s3 + $0x3c] sm:$0xf]
    %v720 = vld [vmem:[%s3 + $0x40] sm:$0xf]
    %v721 = vld [vmem:[%s3 + $0x44] sm:$0xf]
    %v722 = vld [vmem:[%s3 + $0x48] sm:$0xf]
    %v723 = vld [vmem:[%s3 + $0x4c] sm:$0xf]
    %v724 = vld [vmem:[%s3 + $0x50] sm:$0xf]
    %v725 = vld [vmem:[%s3 + $0x54] sm:$0xf]
    %v726 = vld [vmem:[%s3 + $0x58] sm:$0xf]
    %v727 = vld [vmem:[%s3 + $0x5c] sm:$0xf]
    %v728 = vld [vmem:[%s3 + $0x60] sm:$0xf]
    %v729 = vld [vmem:[%s3 + $0x64] sm:$0xf]
    %v730 = vld [vmem:[%s3 + $0x68] sm:$0xf]
    %v731 = vld [vmem:[%s3 + $0x6c] sm:$0xf]
    %v732 = vld [vmem:[%s3 + $0x70] sm:$0xf]
    %v733 = vld [vmem:[%s3 + $0x74] sm:$0xf]
    %v734 = vld [vmem:[%s3 + $0x78] sm:$0xf]
    %v735 = vld [vmem:[%s3 + $0x7c] sm:$0xf]
    %v736 = vld [vmem:[%s10 + $0x2] ss:$0 sm:$0xff]
    %v769 = vunpack.c.l.b16 %v704
    %v770 = vunpack.c.l.b16 %v705
    %v771 = vunpack.c.l.b16 %v706
    %v772 = vunpack.c.l.b16 %v707
    %v773 = vunpack.c.l.b16 %v708
    %v774 = vunpack.c.l.b16 %v709
    %v775 = vunpack.c.l.b16 %v710
    %v776 = vunpack.c.l.b16 %v711
    %v777 = vunpack.c.l.b16 %v712
    %v778 = vunpack.c.l.b16 %v713
    %v779 = vunpack.c.l.b16 %v714
    %v780 = vunpack.c.l.b16 %v715
    %v781 = vunpack.c.l.b16 %v716
    %v782 = vunpack.c.l.b16 %v717
    %v783 = vunpack.c.l.b16 %v718
    %v784 = vunpack.c.l.b16 %v719
    %v785 = vunpack.c.l.b16 %v720
    %v786 = vunpack.c.l.b16 %v721
    %v787 = vunpack.c.l.b16 %v722
    %v788 = vunpack.c.l.b16 %v723
    %v789 = vunpack.c.l.b16 %v724
    %v790 = vunpack.c.l.b16 %v725
    %v791 = vunpack.c.l.b16 %v726
    %v792 = vunpack.c.l.b16 %v727
    %v793 = vunpack.c.l.b16 %v728
    %v794 = vunpack.c.l.b16 %v729
    %v795 = vunpack.c.l.b16 %v730
    %v796 = vunpack.c.l.b16 %v731
    %v797 = vunpack.c.l.b16 %v732
    %v798 = vunpack.c.l.b16 %v733
    %v799 = vunpack.c.l.b16 %v734
    %v800 = vunpack.c.l.b16 %v735
    %v801 = vpack.c.b16 %v770, %v769
    %v802 = vpack.c.b16 %v772, %v771
    %v803 = vpack.c.b16 %v774, %v773
    %v804 = vpack.c.b16 %v776, %v775
    %v805 = vpack.c.b16 %v778, %v777
    %v806 = vpack.c.b16 %v780, %v779
    %v807 = vpack.c.b16 %v782, %v781
    %v808 = vpack.c.b16 %v784, %v783
    %v809 = vpack.c.b16 %v786, %v785
    %v810 = vpack.c.b16 %v788, %v787
    %v811 = vpack.c.b16 %v790, %v789
    %v812 = vpack.c.b16 %v792, %v791
    %v813 = vpack.c.b16 %v794, %v793
    %v814 = vpack.c.b16 %v796, %v795
    %v815 = vpack.c.b16 %v798, %v797
    %v816 = vpack.c.b16 %v800, %v799
    %833 = vmatprep.subr.bf16.mxu0 0
    %834 = vmatpush1.bf16.msra.mxu0 %v801
    %835 = vmatprep.subr.bf16.mxu0 0
    %836 = vmatpush1.bf16.msra.mxu0 %v802
    %837 = vmatprep.subr.bf16.mxu0 0
    %838 = vmatpush1.bf16.msra.mxu0 %v803
    %839 = vmatprep.subr.bf16.mxu0 0
    %840 = vmatpush1.bf16.msra.mxu0 %v804
    %841 = vmatprep.subr.bf16.mxu0 0
    %842 = vmatpush1.bf16.msra.mxu0 %v805
    %843 = vmatprep.subr.bf16.mxu0 0
    %844 = vmatpush1.bf16.msra.mxu0 %v806
    %845 = vmatprep.subr.bf16.mxu0 0
    %846 = vmatpush1.bf16.msra.mxu0 %v807
    %847 = vmatprep.subr.bf16.mxu0 0
    %848 = vmatpush1.bf16.msra.mxu0 %v808
    %849 = vmatprep.subr.bf16.mxu0 0
    %850 = vmatpush1.bf16.msra.mxu0 %v809
    %851 = vmatprep.subr.bf16.mxu0 0
    %852 = vmatpush1.bf16.msra.mxu0 %v810
    %853 = vmatprep.subr.bf16.mxu0 0
    %854 = vmatpush1.bf16.msra.mxu0 %v811
    %855 = vmatprep.subr.bf16.mxu0 0
    %856 = vmatpush1.bf16.msra.mxu0 %v812
    %857 = vmatprep.subr.bf16.mxu0 0
    %858 = vmatpush1.bf16.msra.mxu0 %v813
    %859 = vmatprep.subr.bf16.mxu0 0
    %860 = vmatpush1.bf16.msra.mxu0 %v814
    %861 = vmatprep.subr.bf16.mxu0 0
    %862 = vmatpush1.bf16.msra.mxu0 %v815
    %863 = vmatprep.subr.bf16.mxu0 0
    %864 = vmatpush1.bf16.msra.mxu0 %v816
    %865 = vmatprep.mubr.bf16.mxu0 %v703
    %866 = vmatmul.mubr.bf16.gmra.mrb[0].mxu0 %v702
    %v867 = vpop.f32.mrb[0].mxu0
    %v868 = vadd.f32 %v736, %v867
    %v869 = vpop.f32.mrb[0].mxu0
    %v870 = vpop.f32.mrb[0].mxu0
    %v871 = vpop.f32.mrb[0].mxu0
    %872 = vdwg.mxu0
    %v873 = vmax.f32 %v868, 0.0
    %v874 = vpack.c.bf16 %v873, %v873
    %v875 = vld [vmem:[%s4] sm:$0xf]
    %v876 = vld [vmem:[%s4 + $0x4] sm:$0xf]
    %v877 = vld [vmem:[%s4 + $0x8] sm:$0xf]
    %v878 = vld [vmem:[%s4 + $0xc] sm:$0xf]
    %v879 = vld [vmem:[%s4 + $0x10] sm:$0xf]
    %v880 = vld [vmem:[%s4 + $0x14] sm:$0xf]
    %v881 = vld [vmem:[%s4 + $0x18] sm:$0xf]
    %v882 = vld [vmem:[%s4 + $0x1c] sm:$0xf]
    %v883 = vld [vmem:[%s4 + $0x20] sm:$0xf]
    %v884 = vld [vmem:[%s4 + $0x24] sm:$0xf]
    %v885 = vld [vmem:[%s4 + $0x28] sm:$0xf]
    %v886 = vld [vmem:[%s4 + $0x2c] sm:$0xf]
    %v887 = vld [vmem:[%s4 + $0x30] sm:$0xf]
    %v888 = vld [vmem:[%s4 + $0x34] sm:$0xf]
    %v889 = vld [vmem:[%s4 + $0x38] sm:$0xf]
    %v890 = vld [vmem:[%s4 + $0x3c] sm:$0xf]
    %v891 = vld [vmem:[%s10 + $0x3] ss:$0 sm:$0xff]
    %v908 = vunpack.c.l.b16 %v875
    %v909 = vunpack.c.l.b16 %v876
    %v910 = vunpack.c.l.b16 %v877
    %v911 = vunpack.c.l.b16 %v878
    %v912 = vunpack.c.l.b16 %v879
    %v913 = vunpack.c.l.b16 %v880
    %v914 = vunpack.c.l.b16 %v881
    %v915 = vunpack.c.l.b16 %v882
    %v916 = vunpack.c.l.b16 %v883
    %v917 = vunpack.c.l.b16 %v884
    %v918 = vunpack.c.l.b16 %v885
    %v919 = vunpack.c.l.b16 %v886
    %v920 = vunpack.c.l.b16 %v887
    %v921 = vunpack.c.l.b16 %v888
    %v922 = vunpack.c.l.b16 %v889
    %v923 = vunpack.c.l.b16 %v890
    %v924 = vpack.c.b16 %v909, %v908
    %v925 = vpack.c.b16 %v911, %v910
    %v926 = vpack.c.b16 %v913, %v912
    %v927 = vpack.c.b16 %v915, %v914
    %v928 = vpack.c.b16 %v917, %v916
    %v929 = vpack.c.b16 %v919, %v918
    %v930 = vpack.c.b16 %v921, %v920
    %v931 = vpack.c.b16 %v923, %v922
    %940 = vmatprep.subr.bf16.mxu0 0
    %941 = vmatpush1.bf16.msra.mxu0 %v924
    %942 = vmatprep.subr.bf16.mxu0 0
    %943 = vmatpush1.bf16.msra.mxu0 %v925
    %944 = vmatprep.subr.bf16.mxu0 0
    %945 = vmatpush1.bf16.msra.mxu0 %v926
    %946 = vmatprep.subr.bf16.mxu0 0
    %947 = vmatpush1.bf16.msra.mxu0 %v927
    %948 = vmatprep.subr.bf16.mxu0 0
    %949 = vmatpush1.bf16.msra.mxu0 %v928
    %950 = vmatprep.subr.bf16.mxu0 0
    %951 = vmatpush1.bf16.msra.mxu0 %v929
    %952 = vmatprep.subr.bf16.mxu0 0
    %953 = vmatpush1.bf16.msra.mxu0 %v930
    %954 = vmatprep.subr.bf16.mxu0 0
    %955 = vmatpush1.bf16.msra.mxu0 %v931
    %956 = vmatprep.subr.bf16.mxu0 0
    %957 = vmatpush1.bf16.msra.mxu0 0
    %958 = vmatprep.subr.bf16.mxu0 0
    %959 = vmatpush1.bf16.msra.mxu0 0
    %960 = vmatprep.subr.bf16.mxu0 0
    %961 = vmatpush1.bf16.msra.mxu0 0
    %962 = vmatprep.subr.bf16.mxu0 0
    %963 = vmatpush1.bf16.msra.mxu0 0
    %964 = vmatprep.subr.bf16.mxu0 0
    %965 = vmatpush1.bf16.msra.mxu0 0
    %966 = vmatprep.subr.bf16.mxu0 0
    %967 = vmatpush1.bf16.msra.mxu0 0
    %968 = vmatprep.subr.bf16.mxu0 0
    %969 = vmatpush1.bf16.msra.mxu0 0
    %970 = vmatprep.subr.bf16.mxu0 0
    %971 = vmatpush1.bf16.msra.mxu0 0
    %972 = vmatprep.mubr.bf16.mxu0 0
    %973 = vmatmul.mubr.bf16.gmra.mrb[0].mxu0 %v874
    %v974 = vpop.f32.mrb[0].mxu0
    %v975 = vadd.f32 %v891, %v974
    %v976 = vpop.f32.mrb[0].mxu0
    %v977 = vpop.f32.mrb[0].mxu0
    %v978 = vpop.f32.mrb[0].mxu0
    %979 = vdwg.mxu0
    %v980 = vmul.f32 %v975, 0.5
    %v981 = vmul.f32 %v980, 1.442695
    %v982 = vpow.pop %v981
    %984 = vrot.lane.b32.xlu0 %v982, 127
    %v985 = vpop.permute.xlu0 %984
    %v987 = vmul.f32 %v67, %v985
    %989 = vrot.lane.b32.xlu0 %v987, 119
    %v990 = vpop.permute.xlu0 %989
    %v992 = vadd.f32 %v975, %v990
    %v993 = vpack.c.bf16 %v992, %v992
    %v994 = vld [vmem:[%s5] sm:$0xf]
    %v995 = vld [vmem:[%s5 + $0x4] sm:$0x1]
    %v996 = vld [vmem:[%s6] sm:$0x1]
    %998 = vrot.lane.b32.xlu0 %v68, 121
    %v999 = vpop.permute.xlu0 %998
    %vm1000 = vcmask 15360
    %v1002 = vsel %vm1000, %v999, 0
    %vm1004 = vcmask 1040384
    %v1006 = vsel %vm1004, %v996, 0
    %1008 = vmatprep.subr.bf16.mxu0 0
    %1009 = vmatpush1.bf16.msra.mxu0 %v1006
    %1010 = vmatprep.subr.bf16.mxu0 0
    %1011 = vmatpush1.bf16.msra.mxu0 0
    %1012 = vmatprep.subr.bf16.mxu0 0
    %1013 = vmatpush1.bf16.msra.mxu0 0
    %1014 = vmatprep.subr.bf16.mxu0 0
    %1015 = vmatpush1.bf16.msra.mxu0 0
    %1016 = vmatprep.subr.bf16.mxu0 0
    %1017 = vmatpush1.bf16.msra.mxu0 0
    %1018 = vmatprep.subr.bf16.mxu0 0
    %1019 = vmatpush1.bf16.msra.mxu0 0
    %1020 = vmatprep.subr.bf16.mxu0 0
    %1021 = vmatpush1.bf16.msra.mxu0 0
    %1022 = vmatprep.subr.bf16.mxu0 0
    %1023 = vmatpush1.bf16.msra.mxu0 0
    %1024 = vmatprep.subr.bf16.mxu0 0
    %1025 = vmatpush1.bf16.msra.mxu0 0
    %1026 = vmatprep.subr.bf16.mxu0 0
    %1027 = vmatpush1.bf16.msra.mxu0 0
    %1028 = vmatprep.subr.bf16.mxu0 0
    %1029 = vmatpush1.bf16.msra.mxu0 0
    %1030 = vmatprep.subr.bf16.mxu0 0
    %1031 = vmatpush1.bf16.msra.mxu0 0
    %1032 = vmatprep.subr.bf16.mxu0 0
    %1033 = vmatpush1.bf16.msra.mxu0 0
    %1034 = vmatprep.subr.bf16.mxu0 0
    %1035 = vmatpush1.bf16.msra.mxu0 0
    %1036 = vmatprep.subr.bf16.mxu0 0
    %1037 = vmatpush1.bf16.msra.mxu0 0
    %1038 = vmatprep.subr.bf16.mxu0 0
    %1039 = vmatpush1.bf16.msra.mxu0 0
    %1040 = vmatprep.mubr.bf16.mxu0 0
    %1041 = vmatmul.mubr.bf16.gmra.mrb[0].mxu0 %v1002
    %v1042 = vpop.f32.mrb[0].mxu0
    %v1043 = vadd.f32 0.0, %v1042
    %v1044 = vpop.f32.mrb[0].mxu0
    %v1045 = vpop.f32.mrb[0].mxu0
    %v1046 = vpop.f32.mrb[0].mxu0
    %1047 = vdwg.mxu0
    %v1050 = vunpack.c.l.b16 %v994
    %v1051 = vunpack.c.l.b16 %v995
    %v1052 = vpack.c.b16 %v1051, %v1050
    %vm1053 = vcmask 80896
    %v1055 = vsel %vm1053, %v993, 0
    %v1058 = vsel %vm116, %v1052, 0
    %1060 = vmatprep.subr.bf16.mxu0 0
    %1061 = vmatpush1.bf16.msra.mxu0 %v1058
    %1062 = vmatprep.subr.bf16.mxu0 0
    %1063 = vmatpush1.bf16.msra.mxu0 0
    %1064 = vmatprep.subr.bf16.mxu0 0
    %1065 = vmatpush1.bf16.msra.mxu0 0
    %1066 = vmatprep.subr.bf16.mxu0 0
    %1067 = vmatpush1.bf16.msra.mxu0 0
    %1068 = vmatprep.subr.bf16.mxu0 0
    %1069 = vmatpush1.bf16.msra.mxu0 0
    %1070 = vmatprep.subr.bf16.mxu0 0
    %1071 = vmatpush1.bf16.msra.mxu0 0
    %1072 = vmatprep.subr.bf16.mxu0 0
    %1073 = vmatpush1.bf16.msra.mxu0 0
    %1074 = vmatprep.subr.bf16.mxu0 0
    %1075 = vmatpush1.bf16.msra.mxu0 0
    %1076 = vmatprep.subr.bf16.mxu0 0
    %1077 = vmatpush1.bf16.msra.mxu0 0
    %1078 = vmatprep.subr.bf16.mxu0 0
    %1079 = vmatpush1.bf16.msra.mxu0 0
    %1080 = vmatprep.subr.bf16.mxu0 0
    %1081 = vmatpush1.bf16.msra.mxu0 0
    %1082 = vmatprep.subr.bf16.mxu0 0
    %1083 = vmatpush1.bf16.msra.mxu0 0
    %1084 = vmatprep.subr.bf16.mxu0 0
    %1085 = vmatpush1.bf16.msra.mxu0 0
    %1086 = vmatprep.subr.bf16.mxu0 0
    %1087 = vmatpush1.bf16.msra.mxu0 0
    %1088 = vmatprep.subr.bf16.mxu0 0
    %1089 = vmatpush1.bf16.msra.mxu0 0
    %1090 = vmatprep.subr.bf16.mxu0 0
    %1091 = vmatpush1.bf16.msra.mxu0 0
    %1092 = vmatprep.mubr.bf16.mxu0 0
    %1093 = vmatmul.mubr.bf16.gmra.mrb[0].mxu0 %v1055
    %v1094 = vpop.f32.mrb[0].mxu0
    %v1095 = vadd.f32 %v1043, %v1094
    %v1096 = vpop.f32.mrb[0].mxu0
    %v1097 = vpop.f32.mrb[0].mxu0
    %v1098 = vpop.f32.mrb[0].mxu0
    %1099 = vdwg.mxu0
    %v1100 = vld [vmem:[%s10 + $0x4] ss:$0 sm:$0xff]
    %v1101 = vadd.f32 %v1095, %v1100
    %v1102 = vmax.f32 %v1101, 0.0
    %v1103 = vpack.c.bf16 %v1102, %v1102
    %v1104 = vld [vmem:[%s7] sm:$0xff]
    %v1105 = vld [vmem:[%s7 + $0x8] sm:$0xff]
    %v1106 = vld [vmem:[%s7 + $0x10] sm:$0xff]
    %v1107 = vld [vmem:[%s7 + $0x18] sm:$0xff]
    %v1108 = vld [vmem:[%s7 + $0x20] sm:$0xff]
    %v1109 = vld [vmem:[%s7 + $0x28] sm:$0xff]
    %v1110 = vld [vmem:[%s7 + $0x30] sm:$0xff]
    %v1111 = vld [vmem:[%s7 + $0x38] sm:$0xff]
    %v1112 = vld [vmem:[%s7 + $0x40] sm:$0xff]
    %v1113 = vld [vmem:[%s7 + $0x48] sm:$0xff]
    %v1114 = vld [vmem:[%s7 + $0x50] sm:$0xff]
    %v1115 = vld [vmem:[%s7 + $0x58] sm:$0xff]
    %v1116 = vld [vmem:[%s7 + $0x60] sm:$0xff]
    %v1117 = vld [vmem:[%s7 + $0x68] sm:$0xff]
    %v1118 = vld [vmem:[%s7 + $0x70] sm:$0xff]
    %v1119 = vld [vmem:[%s7 + $0x78] sm:$0xff]
    %s1120 = scalar_lea.vmem %s10, 5
    %v1121 = vld [vmem:[%s1120] ss:$8 sm:$0x3]
    %v1123 = vlaneseq
    %v1124 = vshrl.u32 %v1123, 7
    %v1125 = vsub.s32 0, %v1124
    %v1126 = vrot.slane %v1121, %v1125
    %v1127 = vlaneseq
    %v1128 = vshrl.u32 %v1127, 7
    %v1129 = vsub.s32 1, %v1128
    %v1130 = vrot.slane %v1121, %v1129
    %v1149 = vunpack.c.l.b16 %v1104
    %v1150 = vunpack.c.h.b16 %v1104
    %v1151 = vunpack.c.l.b16 %v1105
    %v1152 = vunpack.c.h.b16 %v1105
    %v1153 = vunpack.c.l.b16 %v1106
    %v1154 = vunpack.c.h.b16 %v1106
    %v1155 = vunpack.c.l.b16 %v1107
    %v1156 = vunpack.c.h.b16 %v1107
    %v1157 = vunpack.c.l.b16 %v1108
    %v1158 = vunpack.c.h.b16 %v1108
    %v1159 = vunpack.c.l.b16 %v1109
    %v1160 = vunpack.c.h.b16 %v1109
    %v1161 = vunpack.c.l.b16 %v1110
    %v1162 = vunpack.c.h.b16 %v1110
    %v1163 = vunpack.c.l.b16 %v1111
    %v1164 = vunpack.c.h.b16 %v1111
    %v1165 = vunpack.c.l.b16 %v1112
    %v1166 = vunpack.c.h.b16 %v1112
    %v1167 = vunpack.c.l.b16 %v1113
    %v1168 = vunpack.c.h.b16 %v1113
    %v1169 = vunpack.c.l.b16 %v1114
    %v1170 = vunpack.c.h.b16 %v1114
    %v1171 = vunpack.c.l.b16 %v1115
    %v1172 = vunpack.c.h.b16 %v1115
    %v1173 = vunpack.c.l.b16 %v1116
    %v1174 = vunpack.c.h.b16 %v1116
    %v1175 = vunpack.c.l.b16 %v1117
    %v1176 = vunpack.c.h.b16 %v1117
    %v1177 = vunpack.c.l.b16 %v1118
    %v1178 = vunpack.c.h.b16 %v1118
    %v1179 = vunpack.c.l.b16 %v1119
    %v1180 = vunpack.c.h.b16 %v1119
    %v1181 = vpack.c.b16 %v1151, %v1149
    %v1182 = vpack.c.b16 %v1152, %v1150
    %v1183 = vpack.c.b16 %v1155, %v1153
    %v1184 = vpack.c.b16 %v1156, %v1154
    %v1185 = vpack.c.b16 %v1159, %v1157
    %v1186 = vpack.c.b16 %v1160, %v1158
    %v1187 = vpack.c.b16 %v1163, %v1161
    %v1188 = vpack.c.b16 %v1164, %v1162
    %v1189 = vpack.c.b16 %v1167, %v1165
    %v1190 = vpack.c.b16 %v1168, %v1166
    %v1191 = vpack.c.b16 %v1171, %v1169
    %v1192 = vpack.c.b16 %v1172, %v1170
    %v1193 = vpack.c.b16 %v1175, %v1173
    %v1194 = vpack.c.b16 %v1176, %v1174
    %v1195 = vpack.c.b16 %v1179, %v1177
    %v1196 = vpack.c.b16 %v1180, %v1178
    %1213 = vmatprep.subr.bf16.mxu0 %v1182
    %1214 = vmatpush1.bf16.msra.mxu0 %v1181
    %1215 = vmatprep.subr.bf16.mxu0 %v1184
    %1216 = vmatpush1.bf16.msra.mxu0 %v1183
    %1217 = vmatprep.subr.bf16.mxu0 %v1186
    %1218 = vmatpush1.bf16.msra.mxu0 %v1185
    %1219 = vmatprep.subr.bf16.mxu0 %v1188
    %1220 = vmatpush1.bf16.msra.mxu0 %v1187
    %1221 = vmatprep.subr.bf16.mxu0 %v1190
    %1222 = vmatpush1.bf16.msra.mxu0 %v1189
    %1223 = vmatprep.subr.bf16.mxu0 %v1192
    %1224 = vmatpush1.bf16.msra.mxu0 %v1191
    %1225 = vmatprep.subr.bf16.mxu0 %v1194
    %1226 = vmatpush1.bf16.msra.mxu0 %v1193
    %1227 = vmatprep.subr.bf16.mxu0 %v1196
    %1228 = vmatpush1.bf16.msra.mxu0 %v1195
    %1229 = vmatprep.subr.bf16.mxu0 0
    %1230 = vmatpush1.bf16.msra.mxu0 0
    %1231 = vmatprep.subr.bf16.mxu0 0
    %1232 = vmatpush1.bf16.msra.mxu0 0
    %1233 = vmatprep.subr.bf16.mxu0 0
    %1234 = vmatpush1.bf16.msra.mxu0 0
    %1235 = vmatprep.subr.bf16.mxu0 0
    %1236 = vmatpush1.bf16.msra.mxu0 0
    %1237 = vmatprep.subr.bf16.mxu0 0
    %1238 = vmatpush1.bf16.msra.mxu0 0
    %1239 = vmatprep.subr.bf16.mxu0 0
    %1240 = vmatpush1.bf16.msra.mxu0 0
    %1241 = vmatprep.subr.bf16.mxu0 0
    %1242 = vmatpush1.bf16.msra.mxu0 0
    %1243 = vmatprep.subr.bf16.mxu0 0
    %1244 = vmatpush1.bf16.msra.mxu0 0
    %1245 = vmatprep.mubr.bf16.mxu0 0
    %1246 = vmatmul.mubr.bf16.gmra.mrb[0].mxu0 %v1103
    %v1247 = vpop.f32.mrb[0].mxu0
    %v1248 = vadd.f32 %v1126, %v1247
    %v1249 = vpop.f32.mrb[0].mxu0
    %v1250 = vadd.f32 %v1130, %v1249
    %v1251 = vpop.f32.mrb[0].mxu0
    %v1252 = vpop.f32.mrb[0].mxu0
    %1253 = vdwg.mxu0
    %v1254 = vmax.f32 %v1248, 0.0
    %v1255 = vmax.f32 %v1250, 0.0
    %v1256 = vpack.c.bf16 %v1254, %v1254
    %v1257 = vpack.c.bf16 %v1255, %v1255
    %v1258 = vld [vmem:[#allocation4] sm:$0xff]
    %v1259 = vld [vmem:[#allocation4 + $0x8] sm:$0xff]
    %v1260 = vld [vmem:[#allocation4 + $0x10] sm:$0xff]
    %v1261 = vld [vmem:[#allocation4 + $0x18] sm:$0xff]
    %v1262 = vld [vmem:[#allocation4 + $0x20] sm:$0xff]
    %v1263 = vld [vmem:[#allocation4 + $0x28] sm:$0xff]
    %v1264 = vld [vmem:[#allocation4 + $0x30] sm:$0xff]
    %v1265 = vld [vmem:[#allocation4 + $0x38] sm:$0xff]
    %v1266 = vld [vmem:[#allocation4 + $0x40] sm:$0xff]
    %v1267 = vld [vmem:[#allocation4 + $0x48] sm:$0xff]
    %v1268 = vld [vmem:[#allocation4 + $0x50] sm:$0xff]
    %v1269 = vld [vmem:[#allocation4 + $0x58] sm:$0xff]
    %v1270 = vld [vmem:[#allocation4 + $0x60] sm:$0xff]
    %v1271 = vld [vmem:[#allocation4 + $0x68] sm:$0xff]
    %v1272 = vld [vmem:[#allocation4 + $0x70] sm:$0xff]
    %v1273 = vld [vmem:[#allocation4 + $0x78] sm:$0xff]
    %v1274 = vld [vmem:[#allocation4 + $0x80] sm:$0xff]
    %v1275 = vld [vmem:[#allocation4 + $0x88] sm:$0xff]
    %v1276 = vld [vmem:[#allocation4 + $0x90] sm:$0xff]
    %v1277 = vld [vmem:[#allocation4 + $0x98] sm:$0xff]
    %v1278 = vld [vmem:[#allocation4 + $0xa0] sm:$0xff]
    %v1279 = vld [vmem:[#allocation4 + $0xa8] sm:$0xff]
    %v1280 = vld [vmem:[#allocation4 + $0xb0] sm:$0xff]
    %v1281 = vld [vmem:[#allocation4 + $0xb8] sm:$0xff]
    %v1282 = vld [vmem:[#allocation4 + $0xc0] sm:$0xff]
    %v1283 = vld [vmem:[#allocation4 + $0xc8] sm:$0xff]
    %v1284 = vld [vmem:[#allocation4 + $0xd0] sm:$0xff]
    %v1285 = vld [vmem:[#allocation4 + $0xd8] sm:$0xff]
    %v1286 = vld [vmem:[#allocation4 + $0xe0] sm:$0xff]
    %v1287 = vld [vmem:[#allocation4 + $0xe8] sm:$0xff]
    %v1288 = vld [vmem:[#allocation4 + $0xf0] sm:$0xff]
    %v1289 = vld [vmem:[#allocation4 + $0xf8] sm:$0xff]
    %v1290 = vld [vmem:[#allocation4 + $0x100] sm:$0xff]
    %v1291 = vld [vmem:[#allocation4 + $0x108] sm:$0xff]
    %v1292 = vld [vmem:[#allocation4 + $0x110] sm:$0xff]
    %v1293 = vld [vmem:[#allocation4 + $0x118] sm:$0xff]
    %v1294 = vld [vmem:[#allocation4 + $0x120] sm:$0xff]
    %v1295 = vld [vmem:[#allocation4 + $0x128] sm:$0xff]
    %v1296 = vld [vmem:[#allocation4 + $0x130] sm:$0xff]
    %v1297 = vld [vmem:[#allocation4 + $0x138] sm:$0xff]
    %v1298 = vld [vmem:[#allocation4 + $0x140] sm:$0xff]
    %v1299 = vld [vmem:[#allocation4 + $0x148] sm:$0xff]
    %v1300 = vld [vmem:[#allocation4 + $0x150] sm:$0xff]
    %v1301 = vld [vmem:[#allocation4 + $0x158] sm:$0xff]
    %v1302 = vld [vmem:[#allocation4 + $0x160] sm:$0xff]
    %v1303 = vld [vmem:[#allocation4 + $0x168] sm:$0xff]
    %v1304 = vld [vmem:[#allocation4 + $0x170] sm:$0xff]
    %v1305 = vld [vmem:[#allocation4 + $0x178] sm:$0xff]
    %v1306 = vld [vmem:[#allocation4 + $0x180] sm:$0xff]
    %v1307 = vld [vmem:[#allocation4 + $0x188] sm:$0xff]
    %v1308 = vld [vmem:[#allocation4 + $0x190] sm:$0xff]
    %v1309 = vld [vmem:[#allocation4 + $0x198] sm:$0xff]
    %v1310 = vld [vmem:[#allocation4 + $0x1a0] sm:$0xff]
    %v1311 = vld [vmem:[#allocation4 + $0x1a8] sm:$0xff]
    %v1312 = vld [vmem:[#allocation4 + $0x1b0] sm:$0xff]
    %v1313 = vld [vmem:[#allocation4 + $0x1b8] sm:$0xff]
    %v1314 = vld [vmem:[#allocation4 + $0x1c0] sm:$0xff]
    %v1315 = vld [vmem:[#allocation4 + $0x1c8] sm:$0xff]
    %v1316 = vld [vmem:[#allocation4 + $0x1d0] sm:$0xff]
    %v1317 = vld [vmem:[#allocation4 + $0x1d8] sm:$0xff]
    %v1318 = vld [vmem:[#allocation4 + $0x1e0] sm:$0xff]
    %v1319 = vld [vmem:[#allocation4 + $0x1e8] sm:$0xff]
    %v1320 = vld [vmem:[#allocation4 + $0x1f0] sm:$0xff]
    %v1321 = vld [vmem:[#allocation4 + $0x1f8] sm:$0xff]
    %s1322 = scalar_lea.vmem %s10, 6
    %v1323 = vld [vmem:[%s1322] ss:$8 sm:$0xf]
    %v1325 = vlaneseq
    %v1326 = vshrl.u32 %v1325, 7
    %v1327 = vsub.s32 0, %v1326
    %v1328 = vrot.slane %v1323, %v1327
    %v1329 = vlaneseq
    %v1330 = vshrl.u32 %v1329, 7
    %v1331 = vsub.s32 1, %v1330
    %v1332 = vrot.slane %v1323, %v1331
    %v1333 = vlaneseq
    %v1334 = vshrl.u32 %v1333, 7
    %v1335 = vsub.s32 2, %v1334
    %v1336 = vrot.slane %v1323, %v1335
    %v1337 = vlaneseq
    %v1338 = vshrl.u32 %v1337, 7
    %v1339 = vsub.s32 3, %v1338
    %v1340 = vrot.slane %v1323, %v1339
    %v1409 = vunpack.c.l.b16 %v1258
    %v1410 = vunpack.c.h.b16 %v1258
    %v1411 = vunpack.c.l.b16 %v1259
    %v1412 = vunpack.c.h.b16 %v1259
    %v1413 = vunpack.c.l.b16 %v1260
    %v1414 = vunpack.c.h.b16 %v1260
    %v1415 = vunpack.c.l.b16 %v1261
    %v1416 = vunpack.c.h.b16 %v1261
    %v1417 = vunpack.c.l.b16 %v1262
    %v1418 = vunpack.c.h.b16 %v1262
    %v1419 = vunpack.c.l.b16 %v1263
    %v1420 = vunpack.c.h.b16 %v1263
    %v1421 = vunpack.c.l.b16 %v1264
    %v1422 = vunpack.c.h.b16 %v1264
    %v1423 = vunpack.c.l.b16 %v1265
    %v1424 = vunpack.c.h.b16 %v1265
    %v1425 = vunpack.c.l.b16 %v1266
    %v1426 = vunpack.c.h.b16 %v1266
    %v1427 = vunpack.c.l.b16 %v1267
    %v1428 = vunpack.c.h.b16 %v1267
    %v1429 = vunpack.c.l.b16 %v1268
    %v1430 = vunpack.c.h.b16 %v1268
    %v1431 = vunpack.c.l.b16 %v1269
    %v1432 = vunpack.c.h.b16 %v1269
    %v1433 = vunpack.c.l.b16 %v1270
    %v1434 = vunpack.c.h.b16 %v1270
    %v1435 = vunpack.c.l.b16 %v1271
    %v1436 = vunpack.c.h.b16 %v1271
    %v1437 = vunpack.c.l.b16 %v1272
    %v1438 = vunpack.c.h.b16 %v1272
    %v1439 = vunpack.c.l.b16 %v1273
    %v1440 = vunpack.c.h.b16 %v1273
    %v1441 = vunpack.c.l.b16 %v1274
    %v1442 = vunpack.c.h.b16 %v1274
    %v1443 = vunpack.c.l.b16 %v1275
    %v1444 = vunpack.c.h.b16 %v1275
    %v1445 = vunpack.c.l.b16 %v1276
    %v1446 = vunpack.c.h.b16 %v1276
    %v1447 = vunpack.c.l.b16 %v1277
    %v1448 = vunpack.c.h.b16 %v1277
    %v1449 = vunpack.c.l.b16 %v1278
    %v1450 = vunpack.c.h.b16 %v1278
    %v1451 = vunpack.c.l.b16 %v1279
    %v1452 = vunpack.c.h.b16 %v1279
    %v1453 = vunpack.c.l.b16 %v1280
    %v1454 = vunpack.c.h.b16 %v1280
    %v1455 = vunpack.c.l.b16 %v1281
    %v1456 = vunpack.c.h.b16 %v1281
    %v1457 = vunpack.c.l.b16 %v1282
    %v1458 = vunpack.c.h.b16 %v1282
    %v1459 = vunpack.c.l.b16 %v1283
    %v1460 = vunpack.c.h.b16 %v1283
    %v1461 = vunpack.c.l.b16 %v1284
    %v1462 = vunpack.c.h.b16 %v1284
    %v1463 = vunpack.c.l.b16 %v1285
    %v1464 = vunpack.c.h.b16 %v1285
    %v1465 = vunpack.c.l.b16 %v1286
    %v1466 = vunpack.c.h.b16 %v1286
    %v1467 = vunpack.c.l.b16 %v1287
    %v1468 = vunpack.c.h.b16 %v1287
    %v1469 = vunpack.c.l.b16 %v1288
    %v1470 = vunpack.c.h.b16 %v1288
    %v1471 = vunpack.c.l.b16 %v1289
    %v1472 = vunpack.c.h.b16 %v1289
    %v1473 = vunpack.c.l.b16 %v1290
    %v1474 = vunpack.c.h.b16 %v1290
    %v1475 = vunpack.c.l.b16 %v1291
    %v1476 = vunpack.c.h.b16 %v1291
    %v1477 = vunpack.c.l.b16 %v1292
    %v1478 = vunpack.c.h.b16 %v1292
    %v1479 = vunpack.c.l.b16 %v1293
    %v1480 = vunpack.c.h.b16 %v1293
    %v1481 = vunpack.c.l.b16 %v1294
    %v1482 = vunpack.c.h.b16 %v1294
    %v1483 = vunpack.c.l.b16 %v1295
    %v1484 = vunpack.c.h.b16 %v1295
    %v1485 = vunpack.c.l.b16 %v1296
    %v1486 = vunpack.c.h.b16 %v1296
    %v1487 = vunpack.c.l.b16 %v1297
    %v1488 = vunpack.c.h.b16 %v1297
    %v1489 = vunpack.c.l.b16 %v1298
    %v1490 = vunpack.c.h.b16 %v1298
    %v1491 = vunpack.c.l.b16 %v1299
    %v1492 = vunpack.c.h.b16 %v1299
    %v1493 = vunpack.c.l.b16 %v1300
    %v1494 = vunpack.c.h.b16 %v1300
    %v1495 = vunpack.c.l.b16 %v1301
    %v1496 = vunpack.c.h.b16 %v1301
    %v1497 = vunpack.c.l.b16 %v1302
    %v1498 = vunpack.c.h.b16 %v1302
    %v1499 = vunpack.c.l.b16 %v1303
    %v1500 = vunpack.c.h.b16 %v1303
    %v1501 = vunpack.c.l.b16 %v1304
    %v1502 = vunpack.c.h.b16 %v1304
    %v1503 = vunpack.c.l.b16 %v1305
    %v1504 = vunpack.c.h.b16 %v1305
    %v1505 = vunpack.c.l.b16 %v1306
    %v1506 = vunpack.c.h.b16 %v1306
    %v1507 = vunpack.c.l.b16 %v1307
    %v1508 = vunpack.c.h.b16 %v1307
    %v1509 = vunpack.c.l.b16 %v1308
    %v1510 = vunpack.c.h.b16 %v1308
    %v1511 = vunpack.c.l.b16 %v1309
    %v1512 = vunpack.c.h.b16 %v1309
    %v1513 = vunpack.c.l.b16 %v1310
    %v1514 = vunpack.c.h.b16 %v1310
    %v1515 = vunpack.c.l.b16 %v1311
    %v1516 = vunpack.c.h.b16 %v1311
    %v1517 = vunpack.c.l.b16 %v1312
    %v1518 = vunpack.c.h.b16 %v1312
    %v1519 = vunpack.c.l.b16 %v1313
    %v1520 = vunpack.c.h.b16 %v1313
    %v1521 = vunpack.c.l.b16 %v1314
    %v1522 = vunpack.c.h.b16 %v1314
    %v1523 = vunpack.c.l.b16 %v1315
    %v1524 = vunpack.c.h.b16 %v1315
    %v1525 = vunpack.c.l.b16 %v1316
    %v1526 = vunpack.c.h.b16 %v1316
    %v1527 = vunpack.c.l.b16 %v1317
    %v1528 = vunpack.c.h.b16 %v1317
    %v1529 = vunpack.c.l.b16 %v1318
    %v1530 = vunpack.c.h.b16 %v1318
    %v1531 = vunpack.c.l.b16 %v1319
    %v1532 = vunpack.c.h.b16 %v1319
    %v1533 = vunpack.c.l.b16 %v1320
    %v1534 = vunpack.c.h.b16 %v1320
    %v1535 = vunpack.c.l.b16 %v1321
    %v1536 = vunpack.c.h.b16 %v1321
    %v1537 = vpack.c.b16 %v1413, %v1409
    %v1538 = vpack.c.b16 %v1414, %v1410
    %v1539 = vpack.c.b16 %v1415, %v1411
    %v1540 = vpack.c.b16 %v1416, %v1412
    %v1541 = vpack.c.b16 %v1421, %v1417
    %v1542 = vpack.c.b16 %v1422, %v1418
    %v1543 = vpack.c.b16 %v1423, %v1419
    %v1544 = vpack.c.b16 %v1424, %v1420
    %v1545 = vpack.c.b16 %v1429, %v1425
    %v1546 = vpack.c.b16 %v1430, %v1426
    %v1547 = vpack.c.b16 %v1431, %v1427
    %v1548 = vpack.c.b16 %v1432, %v1428
    %v1549 = vpack.c.b16 %v1437, %v1433
    %v1550 = vpack.c.b16 %v1438, %v1434
    %v1551 = vpack.c.b16 %v1439, %v1435
    %v1552 = vpack.c.b16 %v1440, %v1436
    %v1553 = vpack.c.b16 %v1445, %v1441
    %v1554 = vpack.c.b16 %v1446, %v1442
    %v1555 = vpack.c.b16 %v1447, %v1443
    %v1556 = vpack.c.b16 %v1448, %v1444
    %v1557 = vpack.c.b16 %v1453, %v1449
    %v1558 = vpack.c.b16 %v1454, %v1450
    %v1559 = vpack.c.b16 %v1455, %v1451
    %v1560 = vpack.c.b16 %v1456, %v1452
    %v1561 = vpack.c.b16 %v1461, %v1457
    %v1562 = vpack.c.b16 %v1462, %v1458
    %v1563 = vpack.c.b16 %v1463, %v1459
    %v1564 = vpack.c.b16 %v1464, %v1460
    %v1565 = vpack.c.b16 %v1469, %v1465
    %v1566 = vpack.c.b16 %v1470, %v1466
    %v1567 = vpack.c.b16 %v1471, %v1467
    %v1568 = vpack.c.b16 %v1472, %v1468
    %v1569 = vpack.c.b16 %v1477, %v1473
    %v1570 = vpack.c.b16 %v1478, %v1474
    %v1571 = vpack.c.b16 %v1479, %v1475
    %v1572 = vpack.c.b16 %v1480, %v1476
    %v1573 = vpack.c.b16 %v1485, %v1481
    %v1574 = vpack.c.b16 %v1486, %v1482
    %v1575 = vpack.c.b16 %v1487, %v1483
    %v1576 = vpack.c.b16 %v1488, %v1484
    %v1577 = vpack.c.b16 %v1493, %v1489
    %v1578 = vpack.c.b16 %v1494, %v1490
    %v1579 = vpack.c.b16 %v1495, %v1491
    %v1580 = vpack.c.b16 %v1496, %v1492
    %v1581 = vpack.c.b16 %v1501, %v1497
    %v1582 = vpack.c.b16 %v1502, %v1498
    %v1583 = vpack.c.b16 %v1503, %v1499
    %v1584 = vpack.c.b16 %v1504, %v1500
    %v1585 = vpack.c.b16 %v1509, %v1505
    %v1586 = vpack.c.b16 %v1510, %v1506
    %v1587 = vpack.c.b16 %v1511, %v1507
    %v1588 = vpack.c.b16 %v1512, %v1508
    %v1589 = vpack.c.b16 %v1517, %v1513
    %v1590 = vpack.c.b16 %v1518, %v1514
    %v1591 = vpack.c.b16 %v1519, %v1515
    %v1592 = vpack.c.b16 %v1520, %v1516
    %v1593 = vpack.c.b16 %v1525, %v1521
    %v1594 = vpack.c.b16 %v1526, %v1522
    %v1595 = vpack.c.b16 %v1527, %v1523
    %v1596 = vpack.c.b16 %v1528, %v1524
    %v1597 = vpack.c.b16 %v1533, %v1529
    %v1598 = vpack.c.b16 %v1534, %v1530
    %v1599 = vpack.c.b16 %v1535, %v1531
    %v1600 = vpack.c.b16 %v1536, %v1532
    %1665 = vmatprep.subr.bf16.mxu0 %v1538
    %1666 = vmatpush1.bf16.msra.mxu0 %v1537
    %1667 = vmatprep.subr.bf16.mxu0 %v1542
    %1668 = vmatpush1.bf16.msra.mxu0 %v1541
    %1669 = vmatprep.subr.bf16.mxu0 %v1546
    %1670 = vmatpush1.bf16.msra.mxu0 %v1545
    %1671 = vmatprep.subr.bf16.mxu0 %v1550
    %1672 = vmatpush1.bf16.msra.mxu0 %v1549
    %1673 = vmatprep.subr.bf16.mxu0 %v1554
    %1674 = vmatpush1.bf16.msra.mxu0 %v1553
    %1675 = vmatprep.subr.bf16.mxu0 %v1558
    %1676 = vmatpush1.bf16.msra.mxu0 %v1557
    %1677 = vmatprep.subr.bf16.mxu0 %v1562
    %1678 = vmatpush1.bf16.msra.mxu0 %v1561
    %1679 = vmatprep.subr.bf16.mxu0 %v1566
    %1680 = vmatpush1.bf16.msra.mxu0 %v1565
    %1681 = vmatprep.subr.bf16.mxu0 %v1570
    %1682 = vmatpush1.bf16.msra.mxu0 %v1569
    %1683 = vmatprep.subr.bf16.mxu0 %v1574
    %1684 = vmatpush1.bf16.msra.mxu0 %v1573
    %1685 = vmatprep.subr.bf16.mxu0 %v1578
    %1686 = vmatpush1.bf16.msra.mxu0 %v1577
    %1687 = vmatprep.subr.bf16.mxu0 %v1582
    %1688 = vmatpush1.bf16.msra.mxu0 %v1581
    %1689 = vmatprep.subr.bf16.mxu0 %v1586
    %1690 = vmatpush1.bf16.msra.mxu0 %v1585
    %1691 = vmatprep.subr.bf16.mxu0 %v1590
    %1692 = vmatpush1.bf16.msra.mxu0 %v1589
    %1693 = vmatprep.subr.bf16.mxu0 %v1594
    %1694 = vmatpush1.bf16.msra.mxu0 %v1593
    %1695 = vmatprep.subr.bf16.mxu0 %v1598
    %1696 = vmatpush1.bf16.msra.mxu0 %v1597
    %1697 = vmatprep.mubr.bf16.mxu0 %v1257
    %1698 = vmatmul.mubr.bf16.gmra.mrb[0].mxu0 %v1256
    %v1699 = vpop.f32.mrb[0].mxu0
    %v1700 = vadd.f32 %v1328, %v1699
    %v1701 = vpop.f32.mrb[0].mxu0
    %v1702 = vadd.f32 %v1332, %v1701
    %v1703 = vpop.f32.mrb[0].mxu0
    %v1704 = vpop.f32.mrb[0].mxu0
    %1705 = vdwg.mxu0
    %1706 = vmatprep.subr.bf16.mxu0 %v1540
    %1707 = vmatpush1.bf16.msra.mxu0 %v1539
    %1708 = vmatprep.subr.bf16.mxu0 %v1544
    %1709 = vmatpush1.bf16.msra.mxu0 %v1543
    %1710 = vmatprep.subr.bf16.mxu0 %v1548
    %1711 = vmatpush1.bf16.msra.mxu0 %v1547
    %1712 = vmatprep.subr.bf16.mxu0 %v1552
    %1713 = vmatpush1.bf16.msra.mxu0 %v1551
    %1714 = vmatprep.subr.bf16.mxu0 %v1556
    %1715 = vmatpush1.bf16.msra.mxu0 %v1555
    %1716 = vmatprep.subr.bf16.mxu0 %v1560
    %1717 = vmatpush1.bf16.msra.mxu0 %v1559
    %1718 = vmatprep.subr.bf16.mxu0 %v1564
    %1719 = vmatpush1.bf16.msra.mxu0 %v1563
    %1720 = vmatprep.subr.bf16.mxu0 %v1568
    %1721 = vmatpush1.bf16.msra.mxu0 %v1567
    %1722 = vmatprep.subr.bf16.mxu0 %v1572
    %1723 = vmatpush1.bf16.msra.mxu0 %v1571
    %1724 = vmatprep.subr.bf16.mxu0 %v1576
    %1725 = vmatpush1.bf16.msra.mxu0 %v1575
    %1726 = vmatprep.subr.bf16.mxu0 %v1580
    %1727 = vmatpush1.bf16.msra.mxu0 %v1579
    %1728 = vmatprep.subr.bf16.mxu0 %v1584
    %1729 = vmatpush1.bf16.msra.mxu0 %v1583
    %1730 = vmatprep.subr.bf16.mxu0 %v1588
    %1731 = vmatpush1.bf16.msra.mxu0 %v1587
    %1732 = vmatprep.subr.bf16.mxu0 %v1592
    %1733 = vmatpush1.bf16.msra.mxu0 %v1591
    %1734 = vmatprep.subr.bf16.mxu0 %v1596
    %1735 = vmatpush1.bf16.msra.mxu0 %v1595
    %1736 = vmatprep.subr.bf16.mxu0 %v1600
    %1737 = vmatpush1.bf16.msra.mxu0 %v1599
    %1738 = vmatprep.mubr.bf16.mxu0 %v1257
    %1739 = vmatmul.mubr.bf16.gmra.mrb[0].mxu0 %v1256
    %v1740 = vpop.f32.mrb[0].mxu0
    %v1741 = vadd.f32 %v1336, %v1740
    %v1742 = vpop.f32.mrb[0].mxu0
    %v1743 = vadd.f32 %v1340, %v1742
    %v1744 = vpop.f32.mrb[0].mxu0
    %v1745 = vpop.f32.mrb[0].mxu0
    %1746 = vdwg.mxu0
    %v1747 = vmax.f32 %v1700, 0.0
    %v1748 = vmax.f32 %v1702, 0.0
    %v1749 = vmax.f32 %v1741, 0.0
    %v1750 = vmax.f32 %v1743, 0.0
    %v1751 = vpack.c.bf16 %v1747, %v1747
    %v1752 = vpack.c.bf16 %v1748, %v1748
    %v1753 = vpack.c.bf16 %v1749, %v1749
    %v1754 = vpack.c.bf16 %v1750, %v1750
    %v1755 = vld [vmem:[%s9] sm:$0xf]
    %v1756 = vld [vmem:[%s9 + $0x4] sm:$0xf]
    %v1757 = vld [vmem:[%s9 + $0x8] sm:$0xf]
    %v1758 = vld [vmem:[%s9 + $0xc] sm:$0xf]
    %v1759 = vld [vmem:[%s9 + $0x10] sm:$0xf]
    %v1760 = vld [vmem:[%s9 + $0x14] sm:$0xf]
    %v1761 = vld [vmem:[%s9 + $0x18] sm:$0xf]
    %v1762 = vld [vmem:[%s9 + $0x1c] sm:$0xf]
    %v1763 = vld [vmem:[%s9 + $0x20] sm:$0xf]
    %v1764 = vld [vmem:[%s9 + $0x24] sm:$0xf]
    %v1765 = vld [vmem:[%s9 + $0x28] sm:$0xf]
    %v1766 = vld [vmem:[%s9 + $0x2c] sm:$0xf]
    %v1767 = vld [vmem:[%s9 + $0x30] sm:$0xf]
    %v1768 = vld [vmem:[%s9 + $0x34] sm:$0xf]
    %v1769 = vld [vmem:[%s9 + $0x38] sm:$0xf]
    %v1770 = vld [vmem:[%s9 + $0x3c] sm:$0xf]
    %v1771 = vld [vmem:[%s9 + $0x40] sm:$0xf]
    %v1772 = vld [vmem:[%s9 + $0x44] sm:$0xf]
    %v1773 = vld [vmem:[%s9 + $0x48] sm:$0xf]
    %v1774 = vld [vmem:[%s9 + $0x4c] sm:$0xf]
    %v1775 = vld [vmem:[%s9 + $0x50] sm:$0xf]
    %v1776 = vld [vmem:[%s9 + $0x54] sm:$0xf]
    %v1777 = vld [vmem:[%s9 + $0x58] sm:$0xf]
    %v1778 = vld [vmem:[%s9 + $0x5c] sm:$0xf]
    %v1779 = vld [vmem:[%s9 + $0x60] sm:$0xf]
    %v1780 = vld [vmem:[%s9 + $0x64] sm:$0xf]
    %v1781 = vld [vmem:[%s9 + $0x68] sm:$0xf]
    %v1782 = vld [vmem:[%s9 + $0x6c] sm:$0xf]
    %v1783 = vld [vmem:[%s9 + $0x70] sm:$0xf]
    %v1784 = vld [vmem:[%s9 + $0x74] sm:$0xf]
    %v1785 = vld [vmem:[%s9 + $0x78] sm:$0xf]
    %v1786 = vld [vmem:[%s9 + $0x7c] sm:$0xf]
    %v1787 = vld [vmem:[%s9 + $0x80] sm:$0xf]
    %v1788 = vld [vmem:[%s9 + $0x84] sm:$0xf]
    %v1789 = vld [vmem:[%s9 + $0x88] sm:$0xf]
    %v1790 = vld [vmem:[%s9 + $0x8c] sm:$0xf]
    %v1791 = vld [vmem:[%s9 + $0x90] sm:$0xf]
    %v1792 = vld [vmem:[%s9 + $0x94] sm:$0xf]
    %v1793 = vld [vmem:[%s9 + $0x98] sm:$0xf]
    %v1794 = vld [vmem:[%s9 + $0x9c] sm:$0xf]
    %v1795 = vld [vmem:[%s9 + $0xa0] sm:$0xf]
    %v1796 = vld [vmem:[%s9 + $0xa4] sm:$0xf]
    %v1797 = vld [vmem:[%s9 + $0xa8] sm:$0xf]
    %v1798 = vld [vmem:[%s9 + $0xac] sm:$0xf]
    %v1799 = vld [vmem:[%s9 + $0xb0] sm:$0xf]
    %v1800 = vld [vmem:[%s9 + $0xb4] sm:$0xf]
    %v1801 = vld [vmem:[%s9 + $0xb8] sm:$0xf]
    %v1802 = vld [vmem:[%s9 + $0xbc] sm:$0xf]
    %v1803 = vld [vmem:[%s9 + $0xc0] sm:$0xf]
    %v1804 = vld [vmem:[%s9 + $0xc4] sm:$0xf]
    %v1805 = vld [vmem:[%s9 + $0xc8] sm:$0xf]
    %v1806 = vld [vmem:[%s9 + $0xcc] sm:$0xf]
    %v1807 = vld [vmem:[%s9 + $0xd0] sm:$0xf]
    %v1808 = vld [vmem:[%s9 + $0xd4] sm:$0xf]
    %v1809 = vld [vmem:[%s9 + $0xd8] sm:$0xf]
    %v1810 = vld [vmem:[%s9 + $0xdc] sm:$0xf]
    %v1811 = vld [vmem:[%s9 + $0xe0] sm:$0xf]
    %v1812 = vld [vmem:[%s9 + $0xe4] sm:$0xf]
    %v1813 = vld [vmem:[%s9 + $0xe8] sm:$0xf]
    %v1814 = vld [vmem:[%s9 + $0xec] sm:$0xf]
    %v1815 = vld [vmem:[%s9 + $0xf0] sm:$0xf]
    %v1816 = vld [vmem:[%s9 + $0xf4] sm:$0xf]
    %v1817 = vld [vmem:[%s9 + $0xf8] sm:$0xf]
    %v1818 = vld [vmem:[%s9 + $0xfc] sm:$0xf]
    %v1819 = vld [vmem:[%s10 + $0x7] ss:$0 sm:$0xff]
    %v1884 = vunpack.c.l.b16 %v1755
    %v1885 = vunpack.c.l.b16 %v1756
    %v1886 = vunpack.c.l.b16 %v1757
    %v1887 = vunpack.c.l.b16 %v1758
    %v1888 = vunpack.c.l.b16 %v1759
    %v1889 = vunpack.c.l.b16 %v1760
    %v1890 = vunpack.c.l.b16 %v1761
    %v1891 = vunpack.c.l.b16 %v1762
    %v1892 = vunpack.c.l.b16 %v1763
    %v1893 = vunpack.c.l.b16 %v1764
    %v1894 = vunpack.c.l.b16 %v1765
    %v1895 = vunpack.c.l.b16 %v1766
    %v1896 = vunpack.c.l.b16 %v1767
    %v1897 = vunpack.c.l.b16 %v1768
    %v1898 = vunpack.c.l.b16 %v1769
    %v1899 = vunpack.c.l.b16 %v1770
    %v1900 = vunpack.c.l.b16 %v1771
    %v1901 = vunpack.c.l.b16 %v1772
    %v1902 = vunpack.c.l.b16 %v1773
    %v1903 = vunpack.c.l.b16 %v1774
    %v1904 = vunpack.c.l.b16 %v1775
    %v1905 = vunpack.c.l.b16 %v1776
    %v1906 = vunpack.c.l.b16 %v1777
    %v1907 = vunpack.c.l.b16 %v1778
    %v1908 = vunpack.c.l.b16 %v1779
    %v1909 = vunpack.c.l.b16 %v1780
    %v1910 = vunpack.c.l.b16 %v1781
    %v1911 = vunpack.c.l.b16 %v1782
    %v1912 = vunpack.c.l.b16 %v1783
    %v1913 = vunpack.c.l.b16 %v1784
    %v1914 = vunpack.c.l.b16 %v1785
    %v1915 = vunpack.c.l.b16 %v1786
    %v1916 = vunpack.c.l.b16 %v1787
    %v1917 = vunpack.c.l.b16 %v1788
    %v1918 = vunpack.c.l.b16 %v1789
    %v1919 = vunpack.c.l.b16 %v1790
    %v1920 = vunpack.c.l.b16 %v1791
    %v1921 = vunpack.c.l.b16 %v1792
    %v1922 = vunpack.c.l.b16 %v1793
    %v1923 = vunpack.c.l.b16 %v1794
    %v1924 = vunpack.c.l.b16 %v1795
    %v1925 = vunpack.c.l.b16 %v1796
    %v1926 = vunpack.c.l.b16 %v1797
    %v1927 = vunpack.c.l.b16 %v1798
    %v1928 = vunpack.c.l.b16 %v1799
    %v1929 = vunpack.c.l.b16 %v1800
    %v1930 = vunpack.c.l.b16 %v1801
    %v1931 = vunpack.c.l.b16 %v1802
    %v1932 = vunpack.c.l.b16 %v1803
    %v1933 = vunpack.c.l.b16 %v1804
    %v1934 = vunpack.c.l.b16 %v1805
    %v1935 = vunpack.c.l.b16 %v1806
    %v1936 = vunpack.c.l.b16 %v1807
    %v1937 = vunpack.c.l.b16 %v1808
    %v1938 = vunpack.c.l.b16 %v1809
    %v1939 = vunpack.c.l.b16 %v1810
    %v1940 = vunpack.c.l.b16 %v1811
    %v1941 = vunpack.c.l.b16 %v1812
    %v1942 = vunpack.c.l.b16 %v1813
    %v1943 = vunpack.c.l.b16 %v1814
    %v1944 = vunpack.c.l.b16 %v1815
    %v1945 = vunpack.c.l.b16 %v1816
    %v1946 = vunpack.c.l.b16 %v1817
    %v1947 = vunpack.c.l.b16 %v1818
    %v1948 = vpack.c.b16 %v1885, %v1884
    %v1949 = vpack.c.b16 %v1887, %v1886
    %v1950 = vpack.c.b16 %v1889, %v1888
    %v1951 = vpack.c.b16 %v1891, %v1890
    %v1952 = vpack.c.b16 %v1893, %v1892
    %v1953 = vpack.c.b16 %v1895, %v1894
    %v1954 = vpack.c.b16 %v1897, %v1896
    %v1955 = vpack.c.b16 %v1899, %v1898
    %v1956 = vpack.c.b16 %v1901, %v1900
    %v1957 = vpack.c.b16 %v1903, %v1902
    %v1958 = vpack.c.b16 %v1905, %v1904
    %v1959 = vpack.c.b16 %v1907, %v1906
    %v1960 = vpack.c.b16 %v1909, %v1908
    %v1961 = vpack.c.b16 %v1911, %v1910
    %v1962 = vpack.c.b16 %v1913, %v1912
    %v1963 = vpack.c.b16 %v1915, %v1914
    %v1964 = vpack.c.b16 %v1917, %v1916
    %v1965 = vpack.c.b16 %v1919, %v1918
    %v1966 = vpack.c.b16 %v1921, %v1920
    %v1967 = vpack.c.b16 %v1923, %v1922
    %v1968 = vpack.c.b16 %v1925, %v1924
    %v1969 = vpack.c.b16 %v1927, %v1926
    %v1970 = vpack.c.b16 %v1929, %v1928
    %v1971 = vpack.c.b16 %v1931, %v1930
    %v1972 = vpack.c.b16 %v1933, %v1932
    %v1973 = vpack.c.b16 %v1935, %v1934
    %v1974 = vpack.c.b16 %v1937, %v1936
    %v1975 = vpack.c.b16 %v1939, %v1938
    %v1976 = vpack.c.b16 %v1941, %v1940
    %v1977 = vpack.c.b16 %v1943, %v1942
    %v1978 = vpack.c.b16 %v1945, %v1944
    %v1979 = vpack.c.b16 %v1947, %v1946
    %2012 = vmatprep.subr.bf16.mxu0 0
    %2013 = vmatpush1.bf16.msra.mxu0 %v1948
    %2014 = vmatprep.subr.bf16.mxu0 0
    %2015 = vmatpush1.bf16.msra.mxu0 %v1949
    %2016 = vmatprep.subr.bf16.mxu0 0
    %2017 = vmatpush1.bf16.msra.mxu0 %v1950
    %2018 = vmatprep.subr.bf16.mxu0 0
    %2019 = vmatpush1.bf16.msra.mxu0 %v1951
    %2020 = vmatprep.subr.bf16.mxu0 0
    %2021 = vmatpush1.bf16.msra.mxu0 %v1952
    %2022 = vmatprep.subr.bf16.mxu0 0
    %2023 = vmatpush1.bf16.msra.mxu0 %v1953
    %2024 = vmatprep.subr.bf16.mxu0 0
    %2025 = vmatpush1.bf16.msra.mxu0 %v1954
    %2026 = vmatprep.subr.bf16.mxu0 0
    %2027 = vmatpush1.bf16.msra.mxu0 %v1955
    %2028 = vmatprep.subr.bf16.mxu0 0
    %2029 = vmatpush1.bf16.msra.mxu0 %v1956
    %2030 = vmatprep.subr.bf16.mxu0 0
    %2031 = vmatpush1.bf16.msra.mxu0 %v1957
    %2032 = vmatprep.subr.bf16.mxu0 0
    %2033 = vmatpush1.bf16.msra.mxu0 %v1958
    %2034 = vmatprep.subr.bf16.mxu0 0
    %2035 = vmatpush1.bf16.msra.mxu0 %v1959
    %2036 = vmatprep.subr.bf16.mxu0 0
    %2037 = vmatpush1.bf16.msra.mxu0 %v1960
    %2038 = vmatprep.subr.bf16.mxu0 0
    %2039 = vmatpush1.bf16.msra.mxu0 %v1961
    %2040 = vmatprep.subr.bf16.mxu0 0
    %2041 = vmatpush1.bf16.msra.mxu0 %v1962
    %2042 = vmatprep.subr.bf16.mxu0 0
    %2043 = vmatpush1.bf16.msra.mxu0 %v1963
    %2044 = vmatprep.mubr.bf16.mxu0 %v1752
    %2045 = vmatmul.mubr.bf16.gmra.mrb[0].mxu0 %v1751
    %v2046 = vpop.f32.mrb[0].mxu0
    %v2047 = vadd.f32 %v1819, %v2046
    %v2048 = vpop.f32.mrb[0].mxu0
    %v2049 = vpop.f32.mrb[0].mxu0
    %v2050 = vpop.f32.mrb[0].mxu0
    %2051 = vdwg.mxu0
    %2052 = vmatprep.subr.bf16.mxu0 0
    %2053 = vmatpush1.bf16.msra.mxu0 %v1964
    %2054 = vmatprep.subr.bf16.mxu0 0
    %2055 = vmatpush1.bf16.msra.mxu0 %v1965
    %2056 = vmatprep.subr.bf16.mxu0 0
    %2057 = vmatpush1.bf16.msra.mxu0 %v1966
    %2058 = vmatprep.subr.bf16.mxu0 0
    %2059 = vmatpush1.bf16.msra.mxu0 %v1967
    %2060 = vmatprep.subr.bf16.mxu0 0
    %2061 = vmatpush1.bf16.msra.mxu0 %v1968
    %2062 = vmatprep.subr.bf16.mxu0 0
    %2063 = vmatpush1.bf16.msra.mxu0 %v1969
    %2064 = vmatprep.subr.bf16.mxu0 0
    %2065 = vmatpush1.bf16.msra.mxu0 %v1970
    %2066 = vmatprep.subr.bf16.mxu0 0
    %2067 = vmatpush1.bf16.msra.mxu0 %v1971
    %2068 = vmatprep.subr.bf16.mxu0 0
    %2069 = vmatpush1.bf16.msra.mxu0 %v1972
    %2070 = vmatprep.subr.bf16.mxu0 0
    %2071 = vmatpush1.bf16.msra.mxu0 %v1973
    %2072 = vmatprep.subr.bf16.mxu0 0
    %2073 = vmatpush1.bf16.msra.mxu0 %v1974
    %2074 = vmatprep.subr.bf16.mxu0 0
    %2075 = vmatpush1.bf16.msra.mxu0 %v1975
    %2076 = vmatprep.subr.bf16.mxu0 0
    %2077 = vmatpush1.bf16.msra.mxu0 %v1976
    %2078 = vmatprep.subr.bf16.mxu0 0
    %2079 = vmatpush1.bf16.msra.mxu0 %v1977
    %2080 = vmatprep.subr.bf16.mxu0 0
    %2081 = vmatpush1.bf16.msra.mxu0 %v1978
    %2082 = vmatprep.subr.bf16.mxu0 0
    %2083 = vmatpush1.bf16.msra.mxu0 %v1979
    %2084 = vmatprep.mubr.bf16.mxu0 %v1754
    %2085 = vmatmul.mubr.bf16.gmra.mrb[0].mxu0 %v1753
    %v2086 = vpop.f32.mrb[0].mxu0
    %v2087 = vadd.f32 %v2047, %v2086
    %v2088 = vpop.f32.mrb[0].mxu0
    %v2089 = vpop.f32.mrb[0].mxu0
    %v2090 = vpop.f32.mrb[0].mxu0
    %2091 = vdwg.mxu0
    %v2092 = vxor.u32 %v2087, 2147483648
    %v2093 = vmul.f32 %v2092, 1.442695
    %v2094 = vpow.pop %v2093
    %v2095 = vadd.f32 %v2094, 1.0
    %v2096 = vrcp.pop %v2095
    %v2097 = vmul.f32 1.0, %v2096
    %2098 = vst [vmem:[%s11] sm:$0xff] 0.0
    %vm2099 = vcmask 162816
    %2100 = vst.msk [vmem:[%s11] sm:$0xff] %vm2099, %v975
    %2102 = vrot.lane.b32.xlu0 %v2097, 32
    %v2103 = vpop.permute.xlu0 %2102
    %vm2105 = vcmask 318720
    %2106 = vst.msk [vmem:[%s11] sm:$0xff] %vm2105, %v2103
    // Predicated region
    $region54: #{cvae_forward.1} parent=1 // pred_check
      _
    $region55: #{cvae_forward.1} parent=1 // pred_check_branch
      %2108 = sbr.rel (0) target = $region57
    $region56: #{cvae_forward.1} parent=1 // pred_region
      _
    $region57: #{cvae_forward.1} parent=1 // pred_fallthru
      _
    // Predicated region
    $region58: #{cvae_forward.1} parent=1 // pred_check
      _
    $region59: #{cvae_forward.1} parent=1 // pred_check_branch
      %2110 = sbr.rel (0) target = $region61
    $region60: #{cvae_forward.1} parent=1 // pred_region
      _
    $region61: #{cvae_forward.1} parent=1 // pred_fallthru
      _
    %2111 = vsyncpa [#allocation3], 1
    %2112 = vsyncpa [#allocation5], 1

</llo_original>
